<compile_context>
chip_gen: v6e
topology: v6e:2x2x1
jax: 0.10.0
libtpu: 0.0.40
codegen_flags: <defaults>
</compile_context>

<pallas_src>
import functools  # noqa: F401

import jax
import jax.numpy as jnp
from jax.experimental import pallas as pl
from jax.experimental.pallas import tpu as pltpu


# ---------------------------------------------------------------------------
# In-kernel building blocks
# ---------------------------------------------------------------------------
def _silu(x):
    return x * jax.nn.sigmoid(x)


def _conv1d_same(x, w_flat, b):
    """'same'-padded (odd K) Conv1d as a single im2col matmul.

    x:      (L, C_in)  f32 value (in registers / VMEM)
    w_flat: (K*C_in, C_out) bf16, rows ordered tap-major then channel
    b:      (1, C_out) f32
    Returns (L, C_out) f32.
    """
    L, c_in = x.shape
    K = w_flat.shape[0] // c_in
    pad = (K - 1) // 2
    if pad > 0:
        zrow = jnp.zeros((pad, c_in), x.dtype)
        xp = jnp.concatenate([zrow, x, zrow], axis=0)      # padding fused in-kernel
    else:
        xp = x
    if K > 1:
        xc = jnp.concatenate([xp[t:t + L, :] for t in range(K)], axis=-1)  # (L, K*C_in)
    else:
        xc = xp
    acc = jnp.dot(xc.astype(w_flat.dtype), w_flat,
                  preferred_element_type=jnp.float32)      # one MXU matmul per conv
    return acc + b


# ---------------------------------------------------------------------------
# Fused encoder / decoder kernels (one pallas_call each, grid over batch)
# ---------------------------------------------------------------------------
def _encoder_kernel(x_ref, w1, b1, w2, b2, w3, b3, wq, bq, o_ref):
    # x_ref: (1, L, C_in) channels-last.  Output: (1, L/2, embed_dim).
    L = x_ref.shape[1]
    Lh = L // 2

    h = _silu(_conv1d_same(x_ref[0], w1[...], b1[...]))            # (L, ch)

    # stride-2 downsample as an exact 0/1 selection matmul
    ri = jax.lax.broadcasted_iota(jnp.int32, (Lh, L), 0)
    ci = jax.lax.broadcasted_iota(jnp.int32, (Lh, L), 1)
    sel = (ci == 2 * ri).astype(jnp.float32)
    h = jnp.dot(sel, h, preferred_element_type=jnp.float32)        # (Lh, ch)

    h = _silu(_conv1d_same(h, w2[...], b2[...]))                   # (Lh, ch)
    h = _conv1d_same(h, w3[...], b3[...])                          # (Lh, 2*z_channels)
    zq = _conv1d_same(h, wq[...], bq[...])                         # 1x1 quant conv
    o_ref[0] = zq.astype(o_ref.dtype)


def _decoder_kernel(z_ref, wpq, bpq, w1, b1, w2, b2, w3, b3, o_ref):
    # z_ref: (1, L/2, zdim) channels-last.  Output: (1, L, in_ch).
    Lh = z_ref.shape[1]
    L = 2 * Lh

    h = _conv1d_same(z_ref[0], wpq[...], bpq[...])                 # 1x1 post_quant conv
    h = _silu(_conv1d_same(h, w1[...], b1[...]))                   # (Lh, ch)

    # x2 nearest-neighbor upsample as an exact 0/1 selection matmul
    ri = jax.lax.broadcasted_iota(jnp.int32, (L, Lh), 0)
    ci = jax.lax.broadcasted_iota(jnp.int32, (L, Lh), 1)
    up = ((2 * ci == ri) | (2 * ci + 1 == ri)).astype(jnp.float32)
    h = jnp.dot(up, h, preferred_element_type=jnp.float32)         # (L, ch)

    h = _silu(_conv1d_same(h, w2[...], b2[...]))                   # (L, ch)
    h = _conv1d_same(h, w3[...], b3[...])                          # (L, in_ch)
    o_ref[0] = h.astype(o_ref.dtype)


def _rep_spec(arr):
    # Replicated (grid-invariant) block: Pallas skips re-DMA when the block
    # index is unchanged across consecutive grid steps.
    return pl.BlockSpec(arr.shape, lambda i: (0,) * arr.ndim)


def encode_pallas(kp, x_nlc):
    """x_nlc: (B, L, C_in) channels-last.  Returns z_params (B, L/2, embed_dim)."""
    B, L, c_in = x_nlc.shape
    w1, b1 = kp["enc_conv1"]
    w2, b2 = kp["enc_conv2"]
    w3, b3 = kp["enc_out"]
    wq, bq = kp["quant"]
    ch = w1.shape[1]
    z2 = w3.shape[1]
    ed = wq.shape[1]
    Lh = L // 2

    weights = (w1, b1, w2, b2, w3, b3, wq, bq)
    flops = 2 * B * (L * w1.shape[0] * ch + Lh * L * ch
                     + Lh * w2.shape[0] * ch + Lh * w3.shape[0] * z2
                     + Lh * wq.shape[0] * ed)
    transcendentals = B * ch * (L + Lh)
    bytes_accessed = 4 * (x_nlc.size + B * Lh * ed) + sum(
        int(a.size) * a.dtype.itemsize for a in weights)

    return pl.pallas_call(
        _encoder_kernel,
        out_shape=jax.ShapeDtypeStruct((B, Lh, ed), jnp.float32),
        grid=(B,),
        in_specs=[pl.BlockSpec((1, L, c_in), lambda i: (i, 0, 0))]
                 + [_rep_spec(a) for a in weights],
        out_specs=pl.BlockSpec((1, Lh, ed), lambda i: (i, 0, 0)),
        compiler_params=pltpu.CompilerParams(dimension_semantics=("parallel",)),
        cost_estimate=pl.CostEstimate(flops=int(flops),
                                      transcendentals=int(transcendentals),
                                      bytes_accessed=int(bytes_accessed)),
    )(x_nlc, *weights)


def decode_pallas(kp, z_nlc):
    """z_nlc: (B, L/2, zdim) channels-last.  Returns dec (B, L, in_ch)."""
    B, Lh, zdim = z_nlc.shape
    wpq, bpq = kp["post_quant"]
    w1, b1 = kp["dec_conv_in"]
    w2, b2 = kp["dec_conv2"]
    w3, b3 = kp["dec_out"]
    zc = wpq.shape[1]
    ch = w1.shape[1]
    out_c = w3.shape[1]
    L = 2 * Lh

    weights = (wpq, bpq, w1, b1, w2, b2, w3, b3)
    flops = 2 * B * (Lh * wpq.shape[0] * zc + Lh * w1.shape[0] * ch
                     + L * Lh * ch + L * w2.shape[0] * ch + L * w3.shape[0] * out_c)
    transcendentals = B * ch * (Lh + L)
    bytes_accessed = 4 * (z_nlc.size + B * L * out_c) + sum(
        int(a.size) * a.dtype.itemsize for a in weights)

    return pl.pallas_call(
        _decoder_kernel,
        out_shape=jax.ShapeDtypeStruct((B, L, out_c), jnp.float32),
        grid=(B,),
        in_specs=[pl.BlockSpec((1, Lh, zdim), lambda i: (i, 0, 0))]
                 + [_rep_spec(a) for a in weights],
        out_specs=pl.BlockSpec((1, L, out_c), lambda i: (i, 0, 0)),
        compiler_params=pltpu.CompilerParams(dimension_semantics=("parallel",)),
        cost_estimate=pl.CostEstimate(flops=int(flops),
                                      transcendentals=int(transcendentals),
                                      bytes_accessed=int(bytes_accessed)),
    )(z_nlc, *weights)


# ---------------------------------------------------------------------------
# Deterministic parameter construction + host-side kernel layout prep
# ---------------------------------------------------------------------------
def _conv_params(key, c_out, c_in, k):
    kw, kb = jax.random.split(key)
    fan_in = c_in * k
    w = jax.random.normal(kw, (c_out, c_in, k), jnp.float32) / jnp.sqrt(fan_in)
    b = 0.01 * jax.random.normal(kb, (c_out,), jnp.float32)
    return w, b


def init_tvae_params(key, *, in_ch, ch, z_channels, embed_dim):
    ks = jax.random.split(key, 8)
    return {
        # encoder
        "enc_conv1": _conv_params(ks[0], ch, in_ch, 3),
        "enc_conv2": _conv_params(ks[1], ch, ch, 3),
        "enc_out":   _conv_params(ks[2], 2 * z_channels, ch, 3),
        # quant / post-quant (1x1 convs)
        "quant":      _conv_params(ks[3], embed_dim, 2 * z_channels, 1),
        # TODO(synk): reference __init__ builds post_quant_conv with in_channels =
        # embed_dim, but z produced by encode() has embed_dim//3 channels; we use
        # embed_dim//3 so the forward pass is shape-consistent.
        "post_quant": _conv_params(ks[4], z_channels, embed_dim // 3, 1),
        # decoder
        "dec_conv_in": _conv_params(ks[5], ch, z_channels, 3),
        "dec_conv2":   _conv_params(ks[6], ch, ch, 3),
        "dec_out":     _conv_params(ks[7], in_ch, ch, 3),
    }


def prepare_kernel_params(params):
    """Host-side layout prep: (C_out, C_in, K) -> (K*C_in, C_out) bf16; bias (1, C_out) f32."""
    out = {}
    for name, (w, b) in params.items():
        c_out, c_in, k = w.shape
        w_flat = jnp.transpose(w, (2, 1, 0)).reshape(k * c_in, c_out).astype(jnp.bfloat16)
        out[name] = (w_flat, b.reshape(1, c_out).astype(jnp.float32))
    return out


# ---------------------------------------------------------------------------
# Forward pass (sampling glue in JAX, everything else in two fused Pallas calls)
# ---------------------------------------------------------------------------
def tvae_forward(kp, x, sample_key):
    """x: (B, C_in, L) NCL (PyTorch Conv1d convention)."""
    x_nlc = jnp.transpose(x, (0, 2, 1))                 # single layout change for whole net

    # encode (fused encoder stack + 1x1 quant conv)
    z_params = encode_pallas(kp, x_nlc)                 # (B, L/2, embed_dim) channels-last
    mu, logvar, logdf = jnp.split(z_params, 3, axis=-1)
    df = jnp.exp(logdf) + 2.0
    # TODO(synk): reference calls dist.StudentT(df).rsample(mu.shape), whose result
    # shape is mu.shape + df.shape; we draw one Student-T sample per element
    # (standard reparameterization) so decode() stays shape-consistent.
    eps = jax.random.t(sample_key, df, shape=mu.shape, dtype=mu.dtype)
    z = mu + jnp.exp(0.5 * logvar) * eps                # (B, L/2, embed_dim//3)

    # decode (fused 1x1 post_quant conv + decoder stack)
    dec_nlc = decode_pallas(kp, z)                      # (B, L, in_ch)

    to_ncl = lambda a: jnp.transpose(a, (0, 2, 1))
    return x, to_ncl(dec_nlc), to_ncl(mu), to_ncl(logvar), to_ncl(df)


if __name__ == "__main__":
    B, in_ch, L = 2, 4, 16
    ch, z_channels, embed_dim = 8, 4, 6        # embed_dim divisible by 3 for chunk(.,3)

    root = jax.random.PRNGKey(0)
    k_params, k_x, k_eps = jax.random.split(root, 3)

    params = init_tvae_params(
        k_params, in_ch=in_ch, ch=ch, z_channels=z_channels, embed_dim=embed_dim
    )
    kparams = prepare_kernel_params(params)
    x = jax.random.normal(k_x, (B, in_ch, L), jnp.float32)

    fwd = jax.jit(tvae_forward)
    inputs, dec, mu, logvar, df = fwd(kparams, x, k_eps)
    jax.block_until_ready((inputs, dec, mu, logvar, df))

    assert inputs.shape == (B, in_ch, L)
    assert dec.shape == (B, in_ch, L)
    assert mu.shape == (B, embed_dim // 3, L // 2)
    assert logvar.shape == mu.shape and df.shape == mu.shape
    assert bool(jnp.all(jnp.isfinite(dec)))
    print("KERNEL_OK")
</pallas_src>

<mosaic_0001>
module attributes {stable_mosaic.version = 11 : i64} {
  func.func @_encoder_kernel(%arg0: i32, %arg1: memref<1x16x4xf32, #tpu.memory_space<vmem>>, %arg2: memref<12x8xbf16, #tpu.memory_space<vmem>>, %arg3: memref<1x8xf32, #tpu.memory_space<vmem>>, %arg4: memref<24x8xbf16, #tpu.memory_space<vmem>>, %arg5: memref<1x8xf32, #tpu.memory_space<vmem>>, %arg6: memref<24x8xbf16, #tpu.memory_space<vmem>>, %arg7: memref<1x8xf32, #tpu.memory_space<vmem>>, %arg8: memref<8x6xbf16, #tpu.memory_space<vmem>>, %arg9: memref<1x6xf32, #tpu.memory_space<vmem>>, %arg10: memref<1x8x6xf32, #tpu.memory_space<vmem>>) attributes {dimension_semantics = [#tpu.dimension_semantics<parallel>], iteration_bounds = array<i64: 2>, scalar_prefetch = 0 : i64, scratch_operands = 0 : i64, tpu.core_type = #tpu.core_type<tc>, window_params = [{transform_indices = @transform_0, window_bounds = array<i64: 1, 16, 4>}, {pipeline_mode = #tpu.pipeline_mode<synchronous>, transform_indices = @transform_1, window_bounds = array<i64: 12, 8>}, {pipeline_mode = #tpu.pipeline_mode<synchronous>, transform_indices = @transform_2, window_bounds = array<i64: 1, 8>}, {pipeline_mode = #tpu.pipeline_mode<synchronous>, transform_indices = @transform_3, window_bounds = array<i64: 24, 8>}, {pipeline_mode = #tpu.pipeline_mode<synchronous>, transform_indices = @transform_4, window_bounds = array<i64: 1, 8>}, {pipeline_mode = #tpu.pipeline_mode<synchronous>, transform_indices = @transform_5, window_bounds = array<i64: 24, 8>}, {pipeline_mode = #tpu.pipeline_mode<synchronous>, transform_indices = @transform_6, window_bounds = array<i64: 1, 8>}, {pipeline_mode = #tpu.pipeline_mode<synchronous>, transform_indices = @transform_7, window_bounds = array<i64: 8, 6>}, {pipeline_mode = #tpu.pipeline_mode<synchronous>, transform_indices = @transform_8, window_bounds = array<i64: 1, 6>}, {transform_indices = @transform_9, window_bounds = array<i64: 1, 8, 6>}]} {
    %c0 = arith.constant 0 : index
    %c0_0 = arith.constant 0 : index
    %c0_1 = arith.constant 0 : index
    %0 = vector.load %arg1[%c0, %c0_0, %c0_1] : memref<1x16x4xf32, #tpu.memory_space<vmem>>, vector<1x16x4xf32>
    %1 = vector.shape_cast %0 : vector<1x16x4xf32> to vector<16x4xf32>
    %c0_2 = arith.constant 0 : index
    %c0_3 = arith.constant 0 : index
    %2 = vector.load %arg2[%c0_2, %c0_3] : memref<12x8xbf16, #tpu.memory_space<vmem>>, vector<12x8xbf16>
    %c0_4 = arith.constant 0 : index
    %c0_5 = arith.constant 0 : index
    %3 = vector.load %arg3[%c0_4, %c0_5] : memref<1x8xf32, #tpu.memory_space<vmem>>, vector<1x8xf32>
    %cst = arith.constant 0.000000e+00 : f32
    %4 = vector.broadcast %cst : f32 to vector<1x4xf32>
    %5 = tpu.concatenate %4, %1, %4 in 0 : vector<1x4xf32>, vector<16x4xf32>, vector<1x4xf32> -> vector<18x4xf32>
    %6 = vector.extract_strided_slice %5 {offsets = [0, 0], sizes = [16, 4], strides = [1, 1]} : vector<18x4xf32> to vector<16x4xf32>
    %7 = vector.extract_strided_slice %5 {offsets = [1, 0], sizes = [16, 4], strides = [1, 1]} : vector<18x4xf32> to vector<16x4xf32>
    %8 = vector.extract_strided_slice %5 {offsets = [2, 0], sizes = [16, 4], strides = [1, 1]} : vector<18x4xf32> to vector<16x4xf32>
    %9 = tpu.concatenate %6, %7, %8 in 1 : vector<16x4xf32>, vector<16x4xf32>, vector<16x4xf32> -> vector<16x12xf32>
    %10 = arith.truncf %9 : vector<16x12xf32> to vector<16x12xbf16>
    %cst_6 = arith.constant dense<0.000000e+00> : vector<16x8xf32>
    %11 = tpu.matmul %10, %2, %cst_6 {dimension_numbers = #tpu.dot_dimension_numbers<[1], [0], [0], [1], [0, 0, 1, 1], [], []>} : vector<16x12xbf16>, vector<12x8xbf16>, vector<16x8xf32> -> vector<16x8xf32>
    %12 = vector.broadcast %3 : vector<1x8xf32> to vector<16x8xf32>
    %13 = arith.addf %11, %12 : vector<16x8xf32>
    %14 = arith.negf %13 : vector<16x8xf32>
    %15 = math.exp %14 : vector<16x8xf32>
    %cst_7 = arith.constant 1.000000e+00 : f32
    %16 = vector.broadcast %cst_7 : f32 to vector<16x8xf32>
    %17 = arith.addf %16, %15 : vector<16x8xf32>
    %18 = arith.divf %16, %17 : vector<16x8xf32>
    %19 = arith.mulf %13, %18 : vector<16x8xf32>
    %20 = tpu.iota {dimensions = array<i32: 0>} : vector<8x16xi32>
    %21 = tpu.iota {dimensions = array<i32: 1>} : vector<8x16xi32>
    %c2_i32 = arith.constant 2 : i32
    %22 = vector.broadcast %c2_i32 : i32 to vector<8x16xi32>
    %23 = arith.muli %22, %20 : vector<8x16xi32>
    %24 = arith.cmpi eq, %21, %23 : vector<8x16xi32>
    %25 = arith.extui %24 : vector<8x16xi1> to vector<8x16xi32>
    %26 = arith.sitofp %25 : vector<8x16xi32> to vector<8x16xf32>
    %cst_8 = arith.constant dense<0.000000e+00> : vector<8x8xf32>
    %27 = tpu.matmul %26, %19, %cst_8 {dimension_numbers = #tpu.dot_dimension_numbers<[1], [0], [0], [1], [0, 0, 1, 1], [], []>} : vector<8x16xf32>, vector<16x8xf32>, vector<8x8xf32> -> vector<8x8xf32>
    %c0_9 = arith.constant 0 : index
    %c0_10 = arith.constant 0 : index
    %28 = vector.load %arg4[%c0_9, %c0_10] : memref<24x8xbf16, #tpu.memory_space<vmem>>, vector<24x8xbf16>
    %c0_11 = arith.constant 0 : index
    %c0_12 = arith.constant 0 : index
    %29 = vector.load %arg5[%c0_11, %c0_12] : memref<1x8xf32, #tpu.memory_space<vmem>>, vector<1x8xf32>
    %cst_13 = arith.constant 0.000000e+00 : f32
    %30 = vector.broadcast %cst_13 : f32 to vector<1x8xf32>
    %31 = tpu.concatenate %30, %27, %30 in 0 : vector<1x8xf32>, vector<8x8xf32>, vector<1x8xf32> -> vector<10x8xf32>
    %32 = vector.extract_strided_slice %31 {offsets = [0, 0], sizes = [8, 8], strides = [1, 1]} : vector<10x8xf32> to vector<8x8xf32>
    %33 = vector.extract_strided_slice %31 {offsets = [1, 0], sizes = [8, 8], strides = [1, 1]} : vector<10x8xf32> to vector<8x8xf32>
    %34 = vector.extract_strided_slice %31 {offsets = [2, 0], sizes = [8, 8], strides = [1, 1]} : vector<10x8xf32> to vector<8x8xf32>
    %35 = tpu.concatenate %32, %33, %34 in 1 : vector<8x8xf32>, vector<8x8xf32>, vector<8x8xf32> -> vector<8x24xf32>
    %36 = arith.truncf %35 : vector<8x24xf32> to vector<8x24xbf16>
    %cst_14 = arith.constant dense<0.000000e+00> : vector<8x8xf32>
    %37 = tpu.matmul %36, %28, %cst_14 {dimension_numbers = #tpu.dot_dimension_numbers<[1], [0], [0], [1], [0, 0, 1, 1], [], []>} : vector<8x24xbf16>, vector<24x8xbf16>, vector<8x8xf32> -> vector<8x8xf32>
    %38 = vector.broadcast %29 : vector<1x8xf32> to vector<8x8xf32>
    %39 = arith.addf %37, %38 : vector<8x8xf32>
    %40 = arith.negf %39 : vector<8x8xf32>
    %41 = math.exp %40 : vector<8x8xf32>
    %cst_15 = arith.constant 1.000000e+00 : f32
    %42 = vector.broadcast %cst_15 : f32 to vector<8x8xf32>
    %43 = arith.addf %42, %41 : vector<8x8xf32>
    %44 = arith.divf %42, %43 : vector<8x8xf32>
    %45 = arith.mulf %39, %44 : vector<8x8xf32>
    %c0_16 = arith.constant 0 : index
    %c0_17 = arith.constant 0 : index
    %46 = vector.load %arg6[%c0_16, %c0_17] : memref<24x8xbf16, #tpu.memory_space<vmem>>, vector<24x8xbf16>
    %c0_18 = arith.constant 0 : index
    %c0_19 = arith.constant 0 : index
    %47 = vector.load %arg7[%c0_18, %c0_19] : memref<1x8xf32, #tpu.memory_space<vmem>>, vector<1x8xf32>
    %cst_20 = arith.constant 0.000000e+00 : f32
    %48 = vector.broadcast %cst_20 : f32 to vector<1x8xf32>
    %49 = tpu.concatenate %48, %45, %48 in 0 : vector<1x8xf32>, vector<8x8xf32>, vector<1x8xf32> -> vector<10x8xf32>
    %50 = vector.extract_strided_slice %49 {offsets = [0, 0], sizes = [8, 8], strides = [1, 1]} : vector<10x8xf32> to vector<8x8xf32>
    %51 = vector.extract_strided_slice %49 {offsets = [1, 0], sizes = [8, 8], strides = [1, 1]} : vector<10x8xf32> to vector<8x8xf32>
    %52 = vector.extract_strided_slice %49 {offsets = [2, 0], sizes = [8, 8], strides = [1, 1]} : vector<10x8xf32> to vector<8x8xf32>
    %53 = tpu.concatenate %50, %51, %52 in 1 : vector<8x8xf32>, vector<8x8xf32>, vector<8x8xf32> -> vector<8x24xf32>
    %54 = arith.truncf %53 : vector<8x24xf32> to vector<8x24xbf16>
    %cst_21 = arith.constant dense<0.000000e+00> : vector<8x8xf32>
    %55 = tpu.matmul %54, %46, %cst_21 {dimension_numbers = #tpu.dot_dimension_numbers<[1], [0], [0], [1], [0, 0, 1, 1], [], []>} : vector<8x24xbf16>, vector<24x8xbf16>, vector<8x8xf32> -> vector<8x8xf32>
    %56 = vector.broadcast %47 : vector<1x8xf32> to vector<8x8xf32>
    %57 = arith.addf %55, %56 : vector<8x8xf32>
    %c0_22 = arith.constant 0 : index
    %c0_23 = arith.constant 0 : index
    %58 = vector.load %arg8[%c0_22, %c0_23] : memref<8x6xbf16, #tpu.memory_space<vmem>>, vector<8x6xbf16>
    %c0_24 = arith.constant 0 : index
    %c0_25 = arith.constant 0 : index
    %59 = vector.load %arg9[%c0_24, %c0_25] : memref<1x6xf32, #tpu.memory_space<vmem>>, vector<1x6xf32>
    %60 = arith.truncf %57 : vector<8x8xf32> to vector<8x8xbf16>
    %cst_26 = arith.constant dense<0.000000e+00> : vector<8x6xf32>
    %61 = tpu.matmul %60, %58, %cst_26 {dimension_numbers = #tpu.dot_dimension_numbers<[1], [0], [0], [1], [0, 0, 1, 1], [], []>} : vector<8x8xbf16>, vector<8x6xbf16>, vector<8x6xf32> -> vector<8x6xf32>
    %62 = vector.broadcast %59 : vector<1x6xf32> to vector<8x6xf32>
    %63 = arith.addf %61, %62 : vector<8x6xf32>
    %c0_27 = arith.constant 0 : index
    %c0_28 = arith.constant 0 : index
    %c0_29 = arith.constant 0 : index
    %64 = vector.load %arg10[%c0_27, %c0_28, %c0_29] : memref<1x8x6xf32, #tpu.memory_space<vmem>>, vector<1x8x6xf32>
    %65 = vector.shape_cast %64 : vector<1x8x6xf32> to vector<8x6xf32>
    %66 = vector.shape_cast %63 : vector<8x6xf32> to vector<1x8x6xf32>
    tpu.vector_store %arg10[%c0_27, %c0_28, %c0_29], %66 {strides = array<i32>} : memref<1x8x6xf32, #tpu.memory_space<vmem>>, vector<1x8x6xf32>,
    return
  }
  func.func @transform_0(%arg0: i32) -> (i32, i32, i32) {
    %c0_i32 = arith.constant 0 : i32
    %c0_i32_0 = arith.constant 0 : i32
    %c0_i32_1 = arith.constant 0 : i32
    return %arg0, %c0_i32, %c0_i32_0 : i32, i32, i32
  }
  func.func @transform_1(%arg0: i32) -> (i32, i32) {
    %c0_i32 = arith.constant 0 : i32
    %c0_i32_0 = arith.constant 0 : i32
    %c0_i32_1 = arith.constant 0 : i32
    return %c0_i32, %c0_i32_0 : i32, i32
  }
  func.func @transform_2(%arg0: i32) -> (i32, i32) {
    %c0_i32 = arith.constant 0 : i32
    %c0_i32_0 = arith.constant 0 : i32
    %c0_i32_1 = arith.constant 0 : i32
    return %c0_i32, %c0_i32_0 : i32, i32
  }
  func.func @transform_3(%arg0: i32) -> (i32, i32) {
    %c0_i32 = arith.constant 0 : i32
    %c0_i32_0 = arith.constant 0 : i32
    %c0_i32_1 = arith.constant 0 : i32
    return %c0_i32, %c0_i32_0 : i32, i32
  }
  func.func @transform_4(%arg0: i32) -> (i32, i32) {
    %c0_i32 = arith.constant 0 : i32
    %c0_i32_0 = arith.constant 0 : i32
    %c0_i32_1 = arith.constant 0 : i32
    return %c0_i32, %c0_i32_0 : i32, i32
  }
  func.func @transform_5(%arg0: i32) -> (i32, i32) {
    %c0_i32 = arith.constant 0 : i32
    %c0_i32_0 = arith.constant 0 : i32
    %c0_i32_1 = arith.constant 0 : i32
    return %c0_i32, %c0_i32_0 : i32, i32
  }
  func.func @transform_6(%arg0: i32) -> (i32, i32) {
    %c0_i32 = arith.constant 0 : i32
    %c0_i32_0 = arith.constant 0 : i32
    %c0_i32_1 = arith.constant 0 : i32
    return %c0_i32, %c0_i32_0 : i32, i32
  }
  func.func @transform_7(%arg0: i32) -> (i32, i32) {
    %c0_i32 = arith.constant 0 : i32
    %c0_i32_0 = arith.constant 0 : i32
    %c0_i32_1 = arith.constant 0 : i32
    return %c0_i32, %c0_i32_0 : i32, i32
  }
  func.func @transform_8(%arg0: i32) -> (i32, i32) {
    %c0_i32 = arith.constant 0 : i32
    %c0_i32_0 = arith.constant 0 : i32
    %c0_i32_1 = arith.constant 0 : i32
    return %c0_i32, %c0_i32_0 : i32, i32
  }
  func.func @transform_9(%arg0: i32) -> (i32, i32, i32) {
    %c0_i32 = arith.constant 0 : i32
    %c0_i32_0 = arith.constant 0 : i32
    %c0_i32_1 = arith.constant 0 : i32
    return %arg0, %c0_i32, %c0_i32_0 : i32, i32, i32
  }
}

module attributes {stable_mosaic.version = 11 : i64} {
  func.func @_decoder_kernel(%arg0: i32, %arg1: memref<1x8x2xf32, #tpu.memory_space<vmem>>, %arg2: memref<2x4xbf16, #tpu.memory_space<vmem>>, %arg3: memref<1x4xf32, #tpu.memory_space<vmem>>, %arg4: memref<12x8xbf16, #tpu.memory_space<vmem>>, %arg5: memref<1x8xf32, #tpu.memory_space<vmem>>, %arg6: memref<24x8xbf16, #tpu.memory_space<vmem>>, %arg7: memref<1x8xf32, #tpu.memory_space<vmem>>, %arg8: memref<24x4xbf16, #tpu.memory_space<vmem>>, %arg9: memref<1x4xf32, #tpu.memory_space<vmem>>, %arg10: memref<1x16x4xf32, #tpu.memory_space<vmem>>) attributes {dimension_semantics = [#tpu.dimension_semantics<parallel>], iteration_bounds = array<i64: 2>, scalar_prefetch = 0 : i64, scratch_operands = 0 : i64, tpu.core_type = #tpu.core_type<tc>, window_params = [{transform_indices = @transform_0, window_bounds = array<i64: 1, 8, 2>}, {pipeline_mode = #tpu.pipeline_mode<synchronous>, transform_indices = @transform_1, window_bounds = array<i64: 2, 4>}, {pipeline_mode = #tpu.pipeline_mode<synchronous>, transform_indices = @transform_2, window_bounds = array<i64: 1, 4>}, {pipeline_mode = #tpu.pipeline_mode<synchronous>, transform_indices = @transform_3, window_bounds = array<i64: 12, 8>}, {pipeline_mode = #tpu.pipeline_mode<synchronous>, transform_indices = @transform_4, window_bounds = array<i64: 1, 8>}, {pipeline_mode = #tpu.pipeline_mode<synchronous>, transform_indices = @transform_5, window_bounds = array<i64: 24, 8>}, {pipeline_mode = #tpu.pipeline_mode<synchronous>, transform_indices = @transform_6, window_bounds = array<i64: 1, 8>}, {pipeline_mode = #tpu.pipeline_mode<synchronous>, transform_indices = @transform_7, window_bounds = array<i64: 24, 4>}, {pipeline_mode = #tpu.pipeline_mode<synchronous>, transform_indices = @transform_8, window_bounds = array<i64: 1, 4>}, {transform_indices = @transform_9, window_bounds = array<i64: 1, 16, 4>}]} {
    %c0 = arith.constant 0 : index
    %c0_0 = arith.constant 0 : index
    %c0_1 = arith.constant 0 : index
    %0 = vector.load %arg1[%c0, %c0_0, %c0_1] : memref<1x8x2xf32, #tpu.memory_space<vmem>>, vector<1x8x2xf32>
    %1 = vector.shape_cast %0 : vector<1x8x2xf32> to vector<8x2xf32>
    %c0_2 = arith.constant 0 : index
    %c0_3 = arith.constant 0 : index
    %2 = vector.load %arg2[%c0_2, %c0_3] : memref<2x4xbf16, #tpu.memory_space<vmem>>, vector<2x4xbf16>
    %c0_4 = arith.constant 0 : index
    %c0_5 = arith.constant 0 : index
    %3 = vector.load %arg3[%c0_4, %c0_5] : memref<1x4xf32, #tpu.memory_space<vmem>>, vector<1x4xf32>
    %4 = arith.truncf %1 : vector<8x2xf32> to vector<8x2xbf16>
    %cst = arith.constant dense<0.000000e+00> : vector<8x4xf32>
    %5 = tpu.matmul %4, %2, %cst {dimension_numbers = #tpu.dot_dimension_numbers<[1], [0], [0], [1], [0, 0, 1, 1], [], []>} : vector<8x2xbf16>, vector<2x4xbf16>, vector<8x4xf32> -> vector<8x4xf32>
    %6 = vector.broadcast %3 : vector<1x4xf32> to vector<8x4xf32>
    %7 = arith.addf %5, %6 : vector<8x4xf32>
    %c0_6 = arith.constant 0 : index
    %c0_7 = arith.constant 0 : index
    %8 = vector.load %arg4[%c0_6, %c0_7] : memref<12x8xbf16, #tpu.memory_space<vmem>>, vector<12x8xbf16>
    %c0_8 = arith.constant 0 : index
    %c0_9 = arith.constant 0 : index
    %9 = vector.load %arg5[%c0_8, %c0_9] : memref<1x8xf32, #tpu.memory_space<vmem>>, vector<1x8xf32>
    %cst_10 = arith.constant 0.000000e+00 : f32
    %10 = vector.broadcast %cst_10 : f32 to vector<1x4xf32>
    %11 = tpu.concatenate %10, %7, %10 in 0 : vector<1x4xf32>, vector<8x4xf32>, vector<1x4xf32> -> vector<10x4xf32>
    %12 = vector.extract_strided_slice %11 {offsets = [0, 0], sizes = [8, 4], strides = [1, 1]} : vector<10x4xf32> to vector<8x4xf32>
    %13 = vector.extract_strided_slice %11 {offsets = [1, 0], sizes = [8, 4], strides = [1, 1]} : vector<10x4xf32> to vector<8x4xf32>
    %14 = vector.extract_strided_slice %11 {offsets = [2, 0], sizes = [8, 4], strides = [1, 1]} : vector<10x4xf32> to vector<8x4xf32>
    %15 = tpu.concatenate %12, %13, %14 in 1 : vector<8x4xf32>, vector<8x4xf32>, vector<8x4xf32> -> vector<8x12xf32>
    %16 = arith.truncf %15 : vector<8x12xf32> to vector<8x12xbf16>
    %cst_11 = arith.constant dense<0.000000e+00> : vector<8x8xf32>
    %17 = tpu.matmul %16, %8, %cst_11 {dimension_numbers = #tpu.dot_dimension_numbers<[1], [0], [0], [1], [0, 0, 1, 1], [], []>} : vector<8x12xbf16>, vector<12x8xbf16>, vector<8x8xf32> -> vector<8x8xf32>
    %18 = vector.broadcast %9 : vector<1x8xf32> to vector<8x8xf32>
    %19 = arith.addf %17, %18 : vector<8x8xf32>
    %20 = arith.negf %19 : vector<8x8xf32>
    %21 = math.exp %20 : vector<8x8xf32>
    %cst_12 = arith.constant 1.000000e+00 : f32
    %22 = vector.broadcast %cst_12 : f32 to vector<8x8xf32>
    %23 = arith.addf %22, %21 : vector<8x8xf32>
    %24 = arith.divf %22, %23 : vector<8x8xf32>
    %25 = arith.mulf %19, %24 : vector<8x8xf32>
    %26 = tpu.iota {dimensions = array<i32: 0>} : vector<16x8xi32>
    %27 = tpu.iota {dimensions = array<i32: 1>} : vector<16x8xi32>
    %c2_i32 = arith.constant 2 : i32
    %28 = vector.broadcast %c2_i32 : i32 to vector<16x8xi32>
    %29 = arith.muli %28, %27 : vector<16x8xi32>
    %30 = arith.cmpi eq, %29, %26 : vector<16x8xi32>
    %c2_i32_13 = arith.constant 2 : i32
    %31 = vector.broadcast %c2_i32_13 : i32 to vector<16x8xi32>
    %32 = arith.muli %31, %27 : vector<16x8xi32>
    %c1_i32 = arith.constant 1 : i32
    %33 = vector.broadcast %c1_i32 : i32 to vector<16x8xi32>
    %34 = arith.addi %32, %33 : vector<16x8xi32>
    %35 = arith.cmpi eq, %34, %26 : vector<16x8xi32>
    %36 = arith.ori %30, %35 : vector<16x8xi1>
    %37 = arith.extui %36 : vector<16x8xi1> to vector<16x8xi32>
    %38 = arith.sitofp %37 : vector<16x8xi32> to vector<16x8xf32>
    %cst_14 = arith.constant dense<0.000000e+00> : vector<16x8xf32>
    %39 = tpu.matmul %38, %25, %cst_14 {dimension_numbers = #tpu.dot_dimension_numbers<[1], [0], [0], [1], [0, 0, 1, 1], [], []>} : vector<16x8xf32>, vector<8x8xf32>, vector<16x8xf32> -> vector<16x8xf32>
    %c0_15 = arith.constant 0 : index
    %c0_16 = arith.constant 0 : index
    %40 = vector.load %arg6[%c0_15, %c0_16] : memref<24x8xbf16, #tpu.memory_space<vmem>>, vector<24x8xbf16>
    %c0_17 = arith.constant 0 : index
    %c0_18 = arith.constant 0 : index
    %41 = vector.load %arg7[%c0_17, %c0_18] : memref<1x8xf32, #tpu.memory_space<vmem>>, vector<1x8xf32>
    %cst_19 = arith.constant 0.000000e+00 : f32
    %42 = vector.broadcast %cst_19 : f32 to vector<1x8xf32>
    %43 = tpu.concatenate %42, %39, %42 in 0 : vector<1x8xf32>, vector<16x8xf32>, vector<1x8xf32> -> vector<18x8xf32>
    %44 = vector.extract_strided_slice %43 {offsets = [0, 0], sizes = [16, 8], strides = [1, 1]} : vector<18x8xf32> to vector<16x8xf32>
    %45 = vector.extract_strided_slice %43 {offsets = [1, 0], sizes = [16, 8], strides = [1, 1]} : vector<18x8xf32> to vector<16x8xf32>
    %46 = vector.extract_strided_slice %43 {offsets = [2, 0], sizes = [16, 8], strides = [1, 1]} : vector<18x8xf32> to vector<16x8xf32>
    %47 = tpu.concatenate %44, %45, %46 in 1 : vector<16x8xf32>, vector<16x8xf32>, vector<16x8xf32> -> vector<16x24xf32>
    %48 = arith.truncf %47 : vector<16x24xf32> to vector<16x24xbf16>
    %cst_20 = arith.constant dense<0.000000e+00> : vector<16x8xf32>
    %49 = tpu.matmul %48, %40, %cst_20 {dimension_numbers = #tpu.dot_dimension_numbers<[1], [0], [0], [1], [0, 0, 1, 1], [], []>} : vector<16x24xbf16>, vector<24x8xbf16>, vector<16x8xf32> -> vector<16x8xf32>
    %50 = vector.broadcast %41 : vector<1x8xf32> to vector<16x8xf32>
    %51 = arith.addf %49, %50 : vector<16x8xf32>
    %52 = arith.negf %51 : vector<16x8xf32>
    %53 = math.exp %52 : vector<16x8xf32>
    %cst_21 = arith.constant 1.000000e+00 : f32
    %54 = vector.broadcast %cst_21 : f32 to vector<16x8xf32>
    %55 = arith.addf %54, %53 : vector<16x8xf32>
    %56 = arith.divf %54, %55 : vector<16x8xf32>
    %57 = arith.mulf %51, %56 : vector<16x8xf32>
    %c0_22 = arith.constant 0 : index
    %c0_23 = arith.constant 0 : index
    %58 = vector.load %arg8[%c0_22, %c0_23] : memref<24x4xbf16, #tpu.memory_space<vmem>>, vector<24x4xbf16>
    %c0_24 = arith.constant 0 : index
    %c0_25 = arith.constant 0 : index
    %59 = vector.load %arg9[%c0_24, %c0_25] : memref<1x4xf32, #tpu.memory_space<vmem>>, vector<1x4xf32>
    %cst_26 = arith.constant 0.000000e+00 : f32
    %60 = vector.broadcast %cst_26 : f32 to vector<1x8xf32>
    %61 = tpu.concatenate %60, %57, %60 in 0 : vector<1x8xf32>, vector<16x8xf32>, vector<1x8xf32> -> vector<18x8xf32>
    %62 = vector.extract_strided_slice %61 {offsets = [0, 0], sizes = [16, 8], strides = [1, 1]} : vector<18x8xf32> to vector<16x8xf32>
    %63 = vector.extract_strided_slice %61 {offsets = [1, 0], sizes = [16, 8], strides = [1, 1]} : vector<18x8xf32> to vector<16x8xf32>
    %64 = vector.extract_strided_slice %61 {offsets = [2, 0], sizes = [16, 8], strides = [1, 1]} : vector<18x8xf32> to vector<16x8xf32>
    %65 = tpu.concatenate %62, %63, %64 in 1 : vector<16x8xf32>, vector<16x8xf32>, vector<16x8xf32> -> vector<16x24xf32>
    %66 = arith.truncf %65 : vector<16x24xf32> to vector<16x24xbf16>
    %cst_27 = arith.constant dense<0.000000e+00> : vector<16x4xf32>
    %67 = tpu.matmul %66, %58, %cst_27 {dimension_numbers = #tpu.dot_dimension_numbers<[1], [0], [0], [1], [0, 0, 1, 1], [], []>} : vector<16x24xbf16>, vector<24x4xbf16>, vector<16x4xf32> -> vector<16x4xf32>
    %68 = vector.broadcast %59 : vector<1x4xf32> to vector<16x4xf32>
    %69 = arith.addf %67, %68 : vector<16x4xf32>
    %c0_28 = arith.constant 0 : index
    %c0_29 = arith.constant 0 : index
    %c0_30 = arith.constant 0 : index
    %70 = vector.load %arg10[%c0_28, %c0_29, %c0_30] : memref<1x16x4xf32, #tpu.memory_space<vmem>>, vector<1x16x4xf32>
    %71 = vector.shape_cast %70 : vector<1x16x4xf32> to vector<16x4xf32>
    %72 = vector.shape_cast %69 : vector<16x4xf32> to vector<1x16x4xf32>
    tpu.vector_store %arg10[%c0_28, %c0_29, %c0_30], %72 {strides = array<i32>} : memref<1x16x4xf32, #tpu.memory_space<vmem>>, vector<1x16x4xf32>,
    return
  }
  func.func @transform_0(%arg0: i32) -> (i32, i32, i32) {
    %c0_i32 = arith.constant 0 : i32
    %c0_i32_0 = arith.constant 0 : i32
    %c0_i32_1 = arith.constant 0 : i32
    return %arg0, %c0_i32, %c0_i32_0 : i32, i32, i32
  }
  func.func @transform_1(%arg0: i32) -> (i32, i32) {
    %c0_i32 = arith.constant 0 : i32
    %c0_i32_0 = arith.constant 0 : i32
    %c0_i32_1 = arith.constant 0 : i32
    return %c0_i32, %c0_i32_0 : i32, i32
  }
  func.func @transform_2(%arg0: i32) -> (i32, i32) {
    %c0_i32 = arith.constant 0 : i32
    %c0_i32_0 = arith.constant 0 : i32
    %c0_i32_1 = arith.constant 0 : i32
    return %c0_i32, %c0_i32_0 : i32, i32
  }
  func.func @transform_3(%arg0: i32) -> (i32, i32) {
    %c0_i32 = arith.constant 0 : i32
    %c0_i32_0 = arith.constant 0 : i32
    %c0_i32_1 = arith.constant 0 : i32
    return %c0_i32, %c0_i32_0 : i32, i32
  }
  func.func @transform_4(%arg0: i32) -> (i32, i32) {
    %c0_i32 = arith.constant 0 : i32
    %c0_i32_0 = arith.constant 0 : i32
    %c0_i32_1 = arith.constant 0 : i32
    return %c0_i32, %c0_i32_0 : i32, i32
  }
  func.func @transform_5(%arg0: i32) -> (i32, i32) {
    %c0_i32 = arith.constant 0 : i32
    %c0_i32_0 = arith.constant 0 : i32
    %c0_i32_1 = arith.constant 0 : i32
    return %c0_i32, %c0_i32_0 : i32, i32
  }
  func.func @transform_6(%arg0: i32) -> (i32, i32) {
    %c0_i32 = arith.constant 0 : i32
    %c0_i32_0 = arith.constant 0 : i32
    %c0_i32_1 = arith.constant 0 : i32
    return %c0_i32, %c0_i32_0 : i32, i32
  }
  func.func @transform_7(%arg0: i32) -> (i32, i32) {
    %c0_i32 = arith.constant 0 : i32
    %c0_i32_0 = arith.constant 0 : i32
    %c0_i32_1 = arith.constant 0 : i32
    return %c0_i32, %c0_i32_0 : i32, i32
  }
  func.func @transform_8(%arg0: i32) -> (i32, i32) {
    %c0_i32 = arith.constant 0 : i32
    %c0_i32_0 = arith.constant 0 : i32
    %c0_i32_1 = arith.constant 0 : i32
    return %c0_i32, %c0_i32_0 : i32, i32
  }
  func.func @transform_9(%arg0: i32) -> (i32, i32, i32) {
    %c0_i32 = arith.constant 0 : i32
    %c0_i32_0 = arith.constant 0 : i32
    %c0_i32_1 = arith.constant 0 : i32
    return %arg0, %c0_i32, %c0_i32_0 : i32, i32, i32
  }
}

</mosaic_0001>

<llo_original>
// kernel: tvae_forward.2
$region0: #{tvae_forward.2}
  #allocation0 [shape = 'u32[]', space=smem, size = 0x4, offset = 0x4, fixed_abs, tag = 'smem constant byte address 0x4 - core index']
  #allocation1 [shape = 'u32[144,128]{1,0:T(1,128)}', space=vmem, size = 0x12000, scoped, tag = 'internal scratch']
  %s0 = inlined_call_operand.vmem [shape: f32[2,16,4], index: 0, kind: input, shape index: {}]
  %s1 = inlined_call_operand.vmem [shape: bf16[12,8], index: 1, kind: input, shape index: {}]
  %s2 = inlined_call_operand.vmem [shape: f32[1,8], index: 2, kind: input, shape index: {}]
  %s3 = inlined_call_operand.vmem [shape: bf16[24,8], index: 3, kind: input, shape index: {}]
  %s4 = inlined_call_operand.vmem [shape: f32[1,8], index: 4, kind: input, shape index: {}]
  %s5 = inlined_call_operand.vmem [shape: bf16[24,8], index: 5, kind: input, shape index: {}]
  %s6 = inlined_call_operand.vmem [shape: f32[1,8], index: 6, kind: input, shape index: {}]
  %s7 = inlined_call_operand.vmem [shape: bf16[8,6], index: 7, kind: input, shape index: {}]
  %s8 = inlined_call_operand.vmem [shape: f32[1,6], index: 8, kind: input, shape index: {}]
  %s9 = inlined_call_operand.vmem [shape: f32[2,8,6], index: 9, kind: output, shape index: {}]
  %s10 = sld [smem:[#allocation0]]
  $region69: #{tvae_forward.2} parent=0
    _
  %s12 = ssub.s32 1, %s10
  %s13 = scalar_select 0, %s12, %s10
  loop: start=0, step=1, limit=4
  $region2: #{tvae_forward.2} parent=0 // loop_pre_header
    _
  $region3: #{tvae_forward.2} parent=0 // loop_header
    %s15 = sphi 0, %s19
    %p16 = scmp.ge.s32.totalorder %s15, 4
    %s25 = sphi 0, %s27
    %s28 = sphi 0, %s25
    %s29 = sphi 0, %s28
    %s45 = sphi 0, %s29
    %s49 = sphi 0, %s49
    %s51 = sphi 0, %s49
    %s52 = sphi 0, %s51
    %s66 = sphi 0, %s52
    %s70 = sphi 0, %s70
    %s72 = sphi 0, %s70
    %s73 = sphi 0, %s72
    %s87 = sphi 0, %s73
    %s91 = sphi 0, %s91
    %s93 = sphi 0, %s91
    %s94 = sphi 0, %s93
    %s108 = sphi 0, %s94
    %s112 = sphi 0, %s112
    %s114 = sphi 0, %s112
    %s115 = sphi 0, %s114
    %s129 = sphi 0, %s115
    %s133 = sphi 0, %s133
    %s135 = sphi 0, %s133
    %s136 = sphi 0, %s135
    %s150 = sphi 0, %s136
    %s154 = sphi 0, %s154
    %s156 = sphi 0, %s154
    %s157 = sphi 0, %s156
    %s171 = sphi 0, %s157
    %s175 = sphi 0, %s175
    %s177 = sphi 0, %s175
    %s178 = sphi 0, %s177
    %s192 = sphi 0, %s178
    %s196 = sphi 0, %s196
    %s198 = sphi 0, %s196
    %s199 = sphi 0, %s198
    %s213 = sphi 0, %s199
    %s219 = sphi 0, %s221
    %s222 = sphi 0, %s219
    %s223 = sphi 0, %s222
    %s239 = sphi 0, %s223
  $region4: #{tvae_forward.2} parent=0 // loop_header_branch
    %18 = sbr.rel (%p16) target = $region8
  $region5: #{tvae_forward.2} parent=0 // loop_body
    %s20 = ssub.s32 %s15, 1
    %s21 = ssub.s32 %s15, 2
    %s22 = sadd.s32 %s15, 1
    %s23 = ssub.s32 %s15, %s22
    %p24 = scmp.eq.s32.totalorder %s23, 0
    %s26 = sadd.s32 %s25, 1
    %s27 = scalar_select %p24, %s25, %s26
    %p30 = pneg %p24
    %p31 = scmp.eq.s32.totalorder %s15, 1
    %p32 = por %p30, %p31
    %p33 = scmp.ne.s32.totalorder %s25, %s28
    %p34 = scmp.eq.s32.totalorder %s15, 0
    %p35 = por %p33, %p34
    %p36 = scmp.ne.s32.totalorder %s25, %s28
    %p37 = scmp.eq.s32.totalorder %s20, 1
    %p38 = por %p36, %p37
    %p39 = scmp.ne.s32.totalorder %s28, %s29
    %p40 = scmp.eq.s32.totalorder %s20, 0
    %p41 = por %p39, %p40
    %p42 = scmp.ne.s32.totalorder %s28, %s29
    %p43 = scmp.eq.s32.totalorder %s21, 1
    %p44 = por %p42, %p43
    %p46 = scmp.ne.s32.totalorder %s29, %s45
    %p47 = scmp.eq.s32.totalorder %s21, 0
    %p48 = por %p46, %p47
    %s50 = sadd.s32 %s49, 1
    %p53 = scmp.eq.s32.totalorder %s15, 1
    %p54 = scmp.ne.s32.totalorder %s49, %s51
    %p55 = scmp.eq.s32.totalorder %s15, 0
    %p56 = por %p54, %p55
    %p57 = scmp.ne.s32.totalorder %s49, %s51
    %p58 = scmp.eq.s32.totalorder %s20, 1
    %p59 = por %p57, %p58
    %p60 = scmp.ne.s32.totalorder %s51, %s52
    %p61 = scmp.eq.s32.totalorder %s20, 0
    %p62 = por %p60, %p61
    %p63 = scmp.ne.s32.totalorder %s51, %s52
    %p64 = scmp.eq.s32.totalorder %s21, 1
    %p65 = por %p63, %p64
    %p67 = scmp.ne.s32.totalorder %s52, %s66
    %p68 = scmp.eq.s32.totalorder %s21, 0
    %p69 = por %p67, %p68
    %s71 = sadd.s32 %s70, 1
    %p74 = scmp.eq.s32.totalorder %s15, 1
    %p75 = scmp.ne.s32.totalorder %s70, %s72
    %p76 = scmp.eq.s32.totalorder %s15, 0
    %p77 = por %p75, %p76
    %p78 = scmp.ne.s32.totalorder %s70, %s72
    %p79 = scmp.eq.s32.totalorder %s20, 1
    %p80 = por %p78, %p79
    %p81 = scmp.ne.s32.totalorder %s72, %s73
    %p82 = scmp.eq.s32.totalorder %s20, 0
    %p83 = por %p81, %p82
    %p84 = scmp.ne.s32.totalorder %s72, %s73
    %p85 = scmp.eq.s32.totalorder %s21, 1
    %p86 = por %p84, %p85
    %p88 = scmp.ne.s32.totalorder %s73, %s87
    %p89 = scmp.eq.s32.totalorder %s21, 0
    %p90 = por %p88, %p89
    %s92 = sadd.s32 %s91, 1
    %p95 = scmp.eq.s32.totalorder %s15, 1
    %p96 = scmp.ne.s32.totalorder %s91, %s93
    %p97 = scmp.eq.s32.totalorder %s15, 0
    %p98 = por %p96, %p97
    %p99 = scmp.ne.s32.totalorder %s91, %s93
    %p100 = scmp.eq.s32.totalorder %s20, 1
    %p101 = por %p99, %p100
    %p102 = scmp.ne.s32.totalorder %s93, %s94
    %p103 = scmp.eq.s32.totalorder %s20, 0
    %p104 = por %p102, %p103
    %p105 = scmp.ne.s32.totalorder %s93, %s94
    %p106 = scmp.eq.s32.totalorder %s21, 1
    %p107 = por %p105, %p106
    %p109 = scmp.ne.s32.totalorder %s94, %s108
    %p110 = scmp.eq.s32.totalorder %s21, 0
    %p111 = por %p109, %p110
    %s113 = sadd.s32 %s112, 1
    %p116 = scmp.eq.s32.totalorder %s15, 1
    %p117 = scmp.ne.s32.totalorder %s112, %s114
    %p118 = scmp.eq.s32.totalorder %s15, 0
    %p119 = por %p117, %p118
    %p120 = scmp.ne.s32.totalorder %s112, %s114
    %p121 = scmp.eq.s32.totalorder %s20, 1
    %p122 = por %p120, %p121
    %p123 = scmp.ne.s32.totalorder %s114, %s115
    %p124 = scmp.eq.s32.totalorder %s20, 0
    %p125 = por %p123, %p124
    %p126 = scmp.ne.s32.totalorder %s114, %s115
    %p127 = scmp.eq.s32.totalorder %s21, 1
    %p128 = por %p126, %p127
    %p130 = scmp.ne.s32.totalorder %s115, %s129
    %p131 = scmp.eq.s32.totalorder %s21, 0
    %p132 = por %p130, %p131
    %s134 = sadd.s32 %s133, 1
    %p137 = scmp.eq.s32.totalorder %s15, 1
    %p138 = scmp.ne.s32.totalorder %s133, %s135
    %p139 = scmp.eq.s32.totalorder %s15, 0
    %p140 = por %p138, %p139
    %p141 = scmp.ne.s32.totalorder %s133, %s135
    %p142 = scmp.eq.s32.totalorder %s20, 1
    %p143 = por %p141, %p142
    %p144 = scmp.ne.s32.totalorder %s135, %s136
    %p145 = scmp.eq.s32.totalorder %s20, 0
    %p146 = por %p144, %p145
    %p147 = scmp.ne.s32.totalorder %s135, %s136
    %p148 = scmp.eq.s32.totalorder %s21, 1
    %p149 = por %p147, %p148
    %p151 = scmp.ne.s32.totalorder %s136, %s150
    %p152 = scmp.eq.s32.totalorder %s21, 0
    %p153 = por %p151, %p152
    %s155 = sadd.s32 %s154, 1
    %p158 = scmp.eq.s32.totalorder %s15, 1
    %p159 = scmp.ne.s32.totalorder %s154, %s156
    %p160 = scmp.eq.s32.totalorder %s15, 0
    %p161 = por %p159, %p160
    %p162 = scmp.ne.s32.totalorder %s154, %s156
    %p163 = scmp.eq.s32.totalorder %s20, 1
    %p164 = por %p162, %p163
    %p165 = scmp.ne.s32.totalorder %s156, %s157
    %p166 = scmp.eq.s32.totalorder %s20, 0
    %p167 = por %p165, %p166
    %p168 = scmp.ne.s32.totalorder %s156, %s157
    %p169 = scmp.eq.s32.totalorder %s21, 1
    %p170 = por %p168, %p169
    %p172 = scmp.ne.s32.totalorder %s157, %s171
    %p173 = scmp.eq.s32.totalorder %s21, 0
    %p174 = por %p172, %p173
    %s176 = sadd.s32 %s175, 1
    %p179 = scmp.eq.s32.totalorder %s15, 1
    %p180 = scmp.ne.s32.totalorder %s175, %s177
    %p181 = scmp.eq.s32.totalorder %s15, 0
    %p182 = por %p180, %p181
    %p183 = scmp.ne.s32.totalorder %s175, %s177
    %p184 = scmp.eq.s32.totalorder %s20, 1
    %p185 = por %p183, %p184
    %p186 = scmp.ne.s32.totalorder %s177, %s178
    %p187 = scmp.eq.s32.totalorder %s20, 0
    %p188 = por %p186, %p187
    %p189 = scmp.ne.s32.totalorder %s177, %s178
    %p190 = scmp.eq.s32.totalorder %s21, 1
    %p191 = por %p189, %p190
    %p193 = scmp.ne.s32.totalorder %s178, %s192
    %p194 = scmp.eq.s32.totalorder %s21, 0
    %p195 = por %p193, %p194
    %s197 = sadd.s32 %s196, 1
    %p200 = scmp.eq.s32.totalorder %s15, 1
    %p201 = scmp.ne.s32.totalorder %s196, %s198
    %p202 = scmp.eq.s32.totalorder %s15, 0
    %p203 = por %p201, %p202
    %p204 = scmp.ne.s32.totalorder %s196, %s198
    %p205 = scmp.eq.s32.totalorder %s20, 1
    %p206 = por %p204, %p205
    %p207 = scmp.ne.s32.totalorder %s198, %s199
    %p208 = scmp.eq.s32.totalorder %s20, 0
    %p209 = por %p207, %p208
    %p210 = scmp.ne.s32.totalorder %s198, %s199
    %p211 = scmp.eq.s32.totalorder %s21, 1
    %p212 = por %p210, %p211
    %p214 = scmp.ne.s32.totalorder %s199, %s213
    %p215 = scmp.eq.s32.totalorder %s21, 0
    %p216 = por %p214, %p215
    %s217 = ssub.s32 %s15, %s22
    %p218 = scmp.eq.s32.totalorder %s217, 0
    %s220 = sadd.s32 %s219, 1
    %s221 = scalar_select %p218, %s219, %s220
    %p224 = pneg %p218
    %p225 = scmp.eq.s32.totalorder %s15, 1
    %p226 = por %p224, %p225
    %p227 = scmp.ne.s32.totalorder %s219, %s222
    %p228 = scmp.eq.s32.totalorder %s15, 0
    %p229 = por %p227, %p228
    %p230 = scmp.ne.s32.totalorder %s219, %s222
    %p231 = scmp.eq.s32.totalorder %s20, 1
    %p232 = por %p230, %p231
    %p233 = scmp.ne.s32.totalorder %s222, %s223
    %p234 = scmp.eq.s32.totalorder %s20, 0
    %p235 = por %p233, %p234
    %p236 = scmp.ne.s32.totalorder %s222, %s223
    %p237 = scmp.eq.s32.totalorder %s21, 1
    %p238 = por %p236, %p237
    %p240 = scmp.ne.s32.totalorder %s223, %s239
    %p241 = scmp.eq.s32.totalorder %s21, 0
    %p242 = por %p240, %p241
    %p243 = scmp.le.s32.totalorder 1, %s15
    %p244 = scmp.lt.s32.totalorder %s15, 3
    %p245 = pnand %p243, %p244
    %p246 = pneg %p245
    // Predicated region
    $region9: #{tvae_forward.2} parent=5 // pred_check
      _
    $region10: #{tvae_forward.2} parent=5 // pred_check_branch
      %248 = sbr.rel (%p245) target = $region12
    $region11: #{tvae_forward.2} parent=5 // pred_region
      %s249 = ssub.s32 %s15, 1
      // Predicated region
      $region13: #{tvae_forward.2} parent=11 // pred_check
        %p250 = pneg %p62
      $region14: #{tvae_forward.2} parent=11 // pred_check_branch
        %252 = sbr.rel (%p250) target = $region16
      $region15: #{tvae_forward.2} parent=11 // pred_region
        _
      $region16: #{tvae_forward.2} parent=11 // pred_fallthru
        _
      // Predicated region
      $region17: #{tvae_forward.2} parent=11 // pred_check
        %p253 = pneg %p83
      $region18: #{tvae_forward.2} parent=11 // pred_check_branch
        %255 = sbr.rel (%p253) target = $region20
      $region19: #{tvae_forward.2} parent=11 // pred_region
        _
      $region20: #{tvae_forward.2} parent=11 // pred_fallthru
        _
      // Predicated region
      $region21: #{tvae_forward.2} parent=11 // pred_check
        %p256 = pneg %p104
      $region22: #{tvae_forward.2} parent=11 // pred_check_branch
        %258 = sbr.rel (%p256) target = $region24
      $region23: #{tvae_forward.2} parent=11 // pred_region
        _
      $region24: #{tvae_forward.2} parent=11 // pred_fallthru
        _
      // Predicated region
      $region25: #{tvae_forward.2} parent=11 // pred_check
        %p259 = pneg %p125
      $region26: #{tvae_forward.2} parent=11 // pred_check_branch
        %261 = sbr.rel (%p259) target = $region28
      $region27: #{tvae_forward.2} parent=11 // pred_region
        _
      $region28: #{tvae_forward.2} parent=11 // pred_fallthru
        _
      // Predicated region
      $region29: #{tvae_forward.2} parent=11 // pred_check
        %p262 = pneg %p146
      $region30: #{tvae_forward.2} parent=11 // pred_check_branch
        %264 = sbr.rel (%p262) target = $region32
      $region31: #{tvae_forward.2} parent=11 // pred_region
        _
      $region32: #{tvae_forward.2} parent=11 // pred_fallthru
        _
      // Predicated region
      $region33: #{tvae_forward.2} parent=11 // pred_check
        %p265 = pneg %p167
      $region34: #{tvae_forward.2} parent=11 // pred_check_branch
        %267 = sbr.rel (%p265) target = $region36
      $region35: #{tvae_forward.2} parent=11 // pred_region
        _
      $region36: #{tvae_forward.2} parent=11 // pred_fallthru
        _
      // Predicated region
      $region37: #{tvae_forward.2} parent=11 // pred_check
        %p268 = pneg %p188
      $region38: #{tvae_forward.2} parent=11 // pred_check_branch
        %270 = sbr.rel (%p268) target = $region40
      $region39: #{tvae_forward.2} parent=11 // pred_region
        _
      $region40: #{tvae_forward.2} parent=11 // pred_fallthru
        _
      // Predicated region
      $region41: #{tvae_forward.2} parent=11 // pred_check
        %p271 = pneg %p209
      $region42: #{tvae_forward.2} parent=11 // pred_check_branch
        %273 = sbr.rel (%p271) target = $region44
      $region43: #{tvae_forward.2} parent=11 // pred_region
        _
      $region44: #{tvae_forward.2} parent=11 // pred_fallthru
        _
    $region12: #{tvae_forward.2} parent=5 // pred_fallthru
      _
    %p274 = scmp.lt.s32.totalorder %s15, 2
    // Predicated region
    $region45: #{tvae_forward.2} parent=5 // pred_check
      %p275 = pneg %p274
    $region46: #{tvae_forward.2} parent=5 // pred_check_branch
      %277 = sbr.rel (%p275) target = $region48
    $region47: #{tvae_forward.2} parent=5 // pred_region
      // Predicated region
      $region49: #{tvae_forward.2} parent=47 // pred_check
        %p278 = pneg %p35
      $region50: #{tvae_forward.2} parent=47 // pred_check_branch
        %280 = sbr.rel (%p278) target = $region52
      $region51: #{tvae_forward.2} parent=47 // pred_region
        %p281 = scmp.lt.s32.totalorder %s15, 1
        %s282 = scalar_select %p281, %s15, 1
        %s283 = smul.addr %s282, 2
        %s284 = smul.addr %s283, 8
        %s285 = scalar_lea.vmem %s0, %s284
      $region52: #{tvae_forward.2} parent=47 // pred_fallthru
        _
    $region48: #{tvae_forward.2} parent=5 // pred_fallthru
      _
    %p286 = scmp.le.s32.totalorder 1, %s15
    %p287 = scmp.lt.s32.totalorder %s15, 3
    %p288 = pnand %p286, %p287
    %p289 = pneg %p288
    // Predicated region
    $region53: #{tvae_forward.2} parent=5 // pred_check
      _
    $region54: #{tvae_forward.2} parent=5 // pred_check_branch
      %291 = sbr.rel (%p288) target = $region56
    $region55: #{tvae_forward.2} parent=5 // pred_region
      %s292 = ssub.s32 %s15, 1
      %p293 = scmp.lt.s32.totalorder %s20, 1
      %s294 = scalar_select %p293, %s20, 1
      %s295 = smul.addr %s294, 2
      %s296 = smul.addr %s295, 8
      %s297 = scalar_lea.vmem %s0, %s296
      %p298 = pneg %p41
      %p299 = pneg %p38
      %p300 = pneg %p62
      %p301 = pneg %p59
      %p302 = pneg %p83
      %p303 = pneg %p80
      %p304 = pneg %p104
      %p305 = pneg %p101
      %p306 = pneg %p125
      %p307 = pneg %p122
      %p308 = pneg %p146
      %p309 = pneg %p143
      %p310 = pneg %p167
      %p311 = pneg %p164
      %p312 = pneg %p188
      %p313 = pneg %p185
      %p314 = pneg %p209
      %p315 = pneg %p206
      %p316 = pneg %p235
      %p317 = pneg %p232
      %p318 = scmp.lt.s32.totalorder %s20, 1
      %s319 = scalar_select %p318, %s20, 1
      %s320 = smul.addr %s319, 8
      %s321 = scalar_lea.vmem %s9, %s320
      %p322 = scmp.lt.s32.totalorder %s20, 1
      %s323 = scalar_select %p322, %s20, 1
      %s324 = smul.addr %s323, 2
      %s325 = smul.addr %s324, 8
      %s326 = scalar_lea.vmem %s0, %s325
      %p327 = scmp.lt.s32.totalorder %s20, 1
      %s328 = scalar_select %p327, %s20, 1
      %s329 = smul.addr %s328, 8
      %s330 = scalar_lea.vmem %s9, %s329
      %v332 = vld [vmem:[%s326] sm:$0xff]
      %v333 = vld [vmem:[%s326 + $0x8] sm:$0xff]
      %v334 = vld [vmem:[%s1] sm:$0xf]
      %v335 = vld [vmem:[%s1 + $0x4] sm:$0x3]
      %v336 = vld [vmem:[%s2] sm:$0x1]
      %vm339 = vcmask 1040384
      %v340 = vrot.slane %v332, 7
      %v341 = vrot.slane %v333, 7
      %v342 = vsel %vm339, %v340, %v341
      %v346 = vsel %vm339, 0.0, %v340
      %v347 = vsel %vm339, %v341, 0.0
      %vm350 = vcmask 1046528
      %v351 = vrot.slane %v346, 1
      %v352 = vrot.slane %v342, 1
      %v353 = vsel %vm350, %v351, %v352
      %v354 = vrot.slane %v347, 1
      %v355 = vsel %vm350, %v352, %v354
      %356 = vrot.lane.b32.xlu0 %v353, 4
      %v357 = vpop.permute.xlu0 %356
      %358 = vrot.lane.b32.xlu0 %v355, 4
      %v359 = vpop.permute.xlu0 %358
      %vm362 = vcmask 1045504
      %v363 = vrot.slane %v346, 2
      %v364 = vrot.slane %v342, 2
      %v365 = vsel %vm362, %v363, %v364
      %v366 = vrot.slane %v347, 2
      %v367 = vsel %vm362, %v364, %v366
      %368 = vrot.lane.b32.xlu0 %v365, 8
      %v369 = vpop.permute.xlu0 %368
      %370 = vrot.lane.b32.xlu0 %v367, 8
      %v371 = vpop.permute.xlu0 %370
      %vm374 = vcmask 31744
      %v375 = vsel %vm374, %v346, %v357
      %v376 = vsel %vm374, %v342, %v359
      %vm377 = vcmask 64512
      %v378 = vsel %vm377, %v375, %v369
      %v379 = vsel %vm377, %v376, %v371
      %v380 = vpack.c.bf16 %v379, %v378
      %v382 = vlaneseq
      %v383 = vshrl.u32 %v382, 7
      %v384 = vsub.s32 0, %v383
      %v385 = vrot.slane %v336, %v384
      %v389 = vunpack.c.l.b16 %v334
      %v390 = vunpack.c.l.b16 %v335
      %v391 = vpack.c.b16 %v390, %v389
      %vm392 = vcmask 97280
      %v394 = vsel %vm392, %v380, 0
      %v397 = vsel %vm362, %v391, 0
      %399 = vmatprep.subr.bf16.mxu0 0
      %400 = vmatpush1.bf16.msra.mxu0 0
      %401 = vmatprep.subr.bf16.mxu0 0
      %402 = vmatpush1.bf16.msra.mxu0 0
      %403 = vmatprep.subr.bf16.mxu0 0
      %404 = vmatpush1.bf16.msra.mxu0 0
      %405 = vmatprep.subr.bf16.mxu0 0
      %406 = vmatpush1.bf16.msra.mxu0 0
      %407 = vmatprep.subr.bf16.mxu0 0
      %408 = vmatpush1.bf16.msra.mxu0 0
      %409 = vmatprep.subr.bf16.mxu0 0
      %410 = vmatpush1.bf16.msra.mxu0 0
      %411 = vmatprep.subr.bf16.mxu0 0
      %412 = vmatpush1.bf16.msra.mxu0 0
      %413 = vmatprep.subr.bf16.mxu0 0
      %414 = vmatpush1.bf16.msra.mxu0 %v397
      %415 = vmatprep.subr.bf16.mxu0 0
      %416 = vmatpush2.bf16.msra.mxu0 0
      %417 = vmatprep.subr.bf16.mxu0 0
      %418 = vmatpush2.bf16.msra.mxu0 0
      %419 = vmatprep.subr.bf16.mxu0 0
      %420 = vmatpush2.bf16.msra.mxu0 0
      %421 = vmatprep.subr.bf16.mxu0 0
      %422 = vmatpush2.bf16.msra.mxu0 0
      %423 = vmatprep.subr.bf16.mxu0 0
      %424 = vmatpush2.bf16.msra.mxu0 0
      %425 = vmatprep.subr.bf16.mxu0 0
      %426 = vmatpush2.bf16.msra.mxu0 0
      %427 = vmatprep.subr.bf16.mxu0 0
      %428 = vmatpush2.bf16.msra.mxu0 0
      %429 = vmatprep.subr.bf16.mxu0 0
      %430 = vmatpush2.bf16.msra.mxu0 0
      %431 = vmatprep.mubr.bf16.mxu0 0
      %432 = vmatmul.mubr.bf16.gmra.mxu0 %v394
      %v433 = vpop.f32.mrf.mxu0
      %v434 = vadd.f32 %v385, %v433
      %v435 = vpop.f32.mrf.mxu0
      %v436 = vpop.f32.mrf.mxu0
      %v437 = vadd.f32 %v385, %v436
      %v438 = vpop.f32.mrf.mxu0
      %439 = vdwg.mxu0
      %v440 = vxor.u32 %v434, 2147483648
      %v441 = vxor.u32 %v437, 2147483648
      %v442 = vmul.f32 %v440, 1.442695
      %v443 = vpow.pop %v442
      %v444 = vmul.f32 %v441, 1.442695
      %v445 = vpow.pop %v444
      %v446 = vadd.f32 %v443, 1.0
      %v447 = vadd.f32 %v445, 1.0
      %v448 = vrcp.pop %v446
      %v449 = vmul.f32 1.0, %v448
      %v450 = vrcp.pop %v447
      %v451 = vmul.f32 1.0, %v450
      %v452 = vmul.f32 %v434, %v449
      %v453 = vmul.f32 %v437, %v451
      %v454 = vlaneseq
      %v455 = vshrl.u32 %v454, 7
      %v456 = vlaneseq
      %v457 = vand.u32 %v456, 127
      %v458 = vmul.u32 %v455, 2
      %vm459 = vcmp.eq.s32.totalorder %v457, %v458
      %v460 = vsel %vm459, 1, 0
      %v461 = vcvt.s32.f32 %v460
      %vm462 = vcmask 130048
      %v464 = vsel %vm462, %v461, 0
      %466 = vmatprep.subr.mxu0 0.0
      %467 = vmatpush1.msra.mxu0 0.0
      %468 = vmatprep.subr.mxu0 0.0
      %469 = vmatpush1.msra.mxu0 0.0
      %470 = vmatprep.subr.mxu0 0.0
      %471 = vmatpush1.msra.mxu0 0.0
      %472 = vmatprep.subr.mxu0 0.0
      %473 = vmatpush1.msra.mxu0 0.0
      %474 = vmatprep.subr.mxu0 0.0
      %475 = vmatpush1.msra.mxu0 0.0
      %476 = vmatprep.subr.mxu0 0.0
      %477 = vmatpush1.msra.mxu0 0.0
      %478 = vmatprep.subr.mxu0 0.0
      %479 = vmatpush1.msra.mxu0 0.0
      %480 = vmatprep.subr.mxu0 0.0
      %481 = vmatpush1.msra.mxu0 0.0
      %482 = vmatprep.subr.mxu0 0.0
      %483 = vmatpush1.msra.mxu0 0.0
      %484 = vmatprep.subr.mxu0 0.0
      %485 = vmatpush1.msra.mxu0 0.0
      %486 = vmatprep.subr.mxu0 0.0
      %487 = vmatpush1.msra.mxu0 0.0
      %488 = vmatprep.subr.mxu0 0.0
      %489 = vmatpush1.msra.mxu0 0.0
      %490 = vmatprep.subr.mxu0 0.0
      %491 = vmatpush1.msra.mxu0 0.0
      %492 = vmatprep.subr.mxu0 0.0
      %493 = vmatpush1.msra.mxu0 0.0
      %494 = vmatprep.subr.mxu0 0.0
      %495 = vmatpush1.msra.mxu0 %v453
      %496 = vmatprep.subr.mxu0 0.0
      %497 = vmatpush1.msra.mxu0 %v452
      %498 = vmatprep.subr.mxu0 0.0
      %499 = vmatpush2.msra.mxu0 0.0
      %500 = vmatprep.subr.mxu0 0.0
      %501 = vmatpush2.msra.mxu0 0.0
      %502 = vmatprep.subr.mxu0 0.0
      %503 = vmatpush2.msra.mxu0 0.0
      %504 = vmatprep.subr.mxu0 0.0
      %505 = vmatpush2.msra.mxu0 0.0
      %506 = vmatprep.subr.mxu0 0.0
      %507 = vmatpush2.msra.mxu0 0.0
      %508 = vmatprep.subr.mxu0 0.0
      %509 = vmatpush2.msra.mxu0 0.0
      %510 = vmatprep.subr.mxu0 0.0
      %511 = vmatpush2.msra.mxu0 0.0
      %512 = vmatprep.subr.mxu0 0.0
      %513 = vmatpush2.msra.mxu0 0.0
      %514 = vmatprep.subr.mxu0 0.0
      %515 = vmatpush2.msra.mxu0 0.0
      %516 = vmatprep.subr.mxu0 0.0
      %517 = vmatpush2.msra.mxu0 0.0
      %518 = vmatprep.subr.mxu0 0.0
      %519 = vmatpush2.msra.mxu0 0.0
      %520 = vmatprep.subr.mxu0 0.0
      %521 = vmatpush2.msra.mxu0 0.0
      %522 = vmatprep.subr.mxu0 0.0
      %523 = vmatpush2.msra.mxu0 0.0
      %524 = vmatprep.subr.mxu0 0.0
      %525 = vmatpush2.msra.mxu0 0.0
      %526 = vmatprep.subr.mxu0 0.0
      %527 = vmatpush2.msra.mxu0 0.0
      %528 = vmatprep.subr.mxu0 0.0
      %529 = vmatpush2.msra.mxu0 0.0
      %530 = vmatprep.mubr.f32.mxu0 0.0
      %531 = vmatmul.mubr.f32.gmra.mxu0 %v464
      %v532 = vpop.f32.mrf.mxu0
      %v533 = vadd.f32 0.0, %v532
      %v534 = vpop.f32.mrf.mxu0
      %535 = vdwg.mxu0
      %v536 = vld [vmem:[%s3] sm:$0xf]
      %v537 = vld [vmem:[%s3 + $0x4] sm:$0xf]
      %v538 = vld [vmem:[%s3 + $0x8] sm:$0xf]
      %v539 = vld [vmem:[%s4] sm:$0x1]
      %v541 = vrot.slane %v533, 7
      %v543 = vsel %vm339, 0.0, %v541
      %v544 = vsel %vm339, %v541, 0.0
      %v547 = vrot.slane %v543, 1
      %v548 = vrot.slane %v544, 1
      %v549 = vsel %vm350, %v547, %v548
      %550 = vrot.lane.b32.xlu0 %v549, 8
      %v551 = vpop.permute.xlu0 %550
      %v553 = vrot.slane %v543, 2
      %v554 = vrot.slane %v544, 2
      %v555 = vsel %vm362, %v553, %v554
      %556 = vrot.lane.b32.xlu0 %v555, 16
      %v557 = vpop.permute.xlu0 %556
      %v559 = vsel %vm377, %v543, %v551
      %v560 = vsel %vm462, %v559, %v557
      %v561 = vpack.c.bf16 %v560, %v560
      %v563 = vlaneseq
      %v564 = vshrl.u32 %v563, 7
      %v565 = vsub.s32 0, %v564
      %v566 = vrot.slane %v539, %v565
      %v571 = vunpack.c.l.b16 %v536
      %v572 = vunpack.c.l.b16 %v537
      %v573 = vunpack.c.l.b16 %v538
      %v574 = vpack.c.b16 %v572, %v571
      %v575 = vpack.c.b16 %v573, %v573
      %vm577 = vcmask 195584
      %v579 = vsel %vm577, %v561, 0
      %vm581 = vcmask 1043456
      %v583 = vsel %vm581, %v575, 0
      %585 = vmatprep.subr.bf16.mxu0 0
      %586 = vmatpush1.bf16.msra.mxu0 0
      %587 = vmatprep.subr.bf16.mxu0 0
      %588 = vmatpush1.bf16.msra.mxu0 0
      %589 = vmatprep.subr.bf16.mxu0 0
      %590 = vmatpush1.bf16.msra.mxu0 0
      %591 = vmatprep.subr.bf16.mxu0 0
      %592 = vmatpush1.bf16.msra.mxu0 0
      %593 = vmatprep.subr.bf16.mxu0 0
      %594 = vmatpush1.bf16.msra.mxu0 0
      %595 = vmatprep.subr.bf16.mxu0 0
      %596 = vmatpush1.bf16.msra.mxu0 0
      %597 = vmatprep.subr.bf16.mxu0 0
      %598 = vmatpush1.bf16.msra.mxu0 %v583
      %599 = vmatprep.subr.bf16.mxu0 0
      %600 = vmatpush1.bf16.msra.mxu0 %v574
      %601 = vmatprep.subr.bf16.mxu0 0
      %602 = vmatpush2.bf16.msra.mxu0 0
      %603 = vmatprep.subr.bf16.mxu0 0
      %604 = vmatpush2.bf16.msra.mxu0 0
      %605 = vmatprep.subr.bf16.mxu0 0
      %606 = vmatpush2.bf16.msra.mxu0 0
      %607 = vmatprep.subr.bf16.mxu0 0
      %608 = vmatpush2.bf16.msra.mxu0 0
      %609 = vmatprep.subr.bf16.mxu0 0
      %610 = vmatpush2.bf16.msra.mxu0 0
      %611 = vmatprep.subr.bf16.mxu0 0
      %612 = vmatpush2.bf16.msra.mxu0 0
      %613 = vmatprep.subr.bf16.mxu0 0
      %614 = vmatpush2.bf16.msra.mxu0 0
      %615 = vmatprep.subr.bf16.mxu0 0
      %616 = vmatpush2.bf16.msra.mxu0 0
      %617 = vmatprep.mubr.bf16.mxu0 0
      %618 = vmatmul.mubr.bf16.gmra.mxu0 %v579
      %v619 = vpop.f32.mrf.mxu0
      %v620 = vadd.f32 %v566, %v619
      %v621 = vpop.f32.mrf.mxu0
      %v622 = vpop.f32.mrf.mxu0
      %v623 = vpop.f32.mrf.mxu0
      %624 = vdwg.mxu0
      %v625 = vxor.u32 %v620, 2147483648
      %v626 = vmul.f32 %v625, 1.442695
      %v627 = vpow.pop %v626
      %v628 = vadd.f32 %v627, 1.0
      %v629 = vrcp.pop %v628
      %v630 = vmul.f32 1.0, %v629
      %v631 = vmul.f32 %v620, %v630
      %v632 = vld [vmem:[%s5] sm:$0xf]
      %v633 = vld [vmem:[%s5 + $0x4] sm:$0xf]
      %v634 = vld [vmem:[%s5 + $0x8] sm:$0xf]
      %v635 = vld [vmem:[%s6] sm:$0x1]
      %v637 = vrot.slane %v631, 7
      %v639 = vsel %vm339, 0.0, %v637
      %v640 = vsel %vm339, %v637, 0.0
      %v643 = vrot.slane %v639, 1
      %v644 = vrot.slane %v640, 1
      %v645 = vsel %vm350, %v643, %v644
      %646 = vrot.lane.b32.xlu0 %v645, 8
      %v647 = vpop.permute.xlu0 %646
      %v649 = vrot.slane %v639, 2
      %v650 = vrot.slane %v640, 2
      %v651 = vsel %vm362, %v649, %v650
      %652 = vrot.lane.b32.xlu0 %v651, 16
      %v653 = vpop.permute.xlu0 %652
      %v655 = vsel %vm377, %v639, %v647
      %v656 = vsel %vm462, %v655, %v653
      %v657 = vpack.c.bf16 %v656, %v656
      %v659 = vlaneseq
      %v660 = vshrl.u32 %v659, 7
      %v661 = vsub.s32 0, %v660
      %v662 = vrot.slane %v635, %v661
      %v667 = vunpack.c.l.b16 %v632
      %v668 = vunpack.c.l.b16 %v633
      %v669 = vunpack.c.l.b16 %v634
      %v670 = vpack.c.b16 %v668, %v667
      %v671 = vpack.c.b16 %v669, %v669
      %v674 = vsel %vm577, %v657, 0
      %v677 = vsel %vm581, %v671, 0
      %679 = vmatprep.subr.bf16.mxu0 0
      %680 = vmatpush1.bf16.msra.mxu0 0
      %681 = vmatprep.subr.bf16.mxu0 0
      %682 = vmatpush1.bf16.msra.mxu0 0
      %683 = vmatprep.subr.bf16.mxu0 0
      %684 = vmatpush1.bf16.msra.mxu0 0
      %685 = vmatprep.subr.bf16.mxu0 0
      %686 = vmatpush1.bf16.msra.mxu0 0
      %687 = vmatprep.subr.bf16.mxu0 0
      %688 = vmatpush1.bf16.msra.mxu0 0
      %689 = vmatprep.subr.bf16.mxu0 0
      %690 = vmatpush1.bf16.msra.mxu0 0
      %691 = vmatprep.subr.bf16.mxu0 0
      %692 = vmatpush1.bf16.msra.mxu0 %v677
      %693 = vmatprep.subr.bf16.mxu0 0
      %694 = vmatpush1.bf16.msra.mxu0 %v670
      %695 = vmatprep.subr.bf16.mxu0 0
      %696 = vmatpush2.bf16.msra.mxu0 0
      %697 = vmatprep.subr.bf16.mxu0 0
      %698 = vmatpush2.bf16.msra.mxu0 0
      %699 = vmatprep.subr.bf16.mxu0 0
      %700 = vmatpush2.bf16.msra.mxu0 0
      %701 = vmatprep.subr.bf16.mxu0 0
      %702 = vmatpush2.bf16.msra.mxu0 0
      %703 = vmatprep.subr.bf16.mxu0 0
      %704 = vmatpush2.bf16.msra.mxu0 0
      %705 = vmatprep.subr.bf16.mxu0 0
      %706 = vmatpush2.bf16.msra.mxu0 0
      %707 = vmatprep.subr.bf16.mxu0 0
      %708 = vmatpush2.bf16.msra.mxu0 0
      %709 = vmatprep.subr.bf16.mxu0 0
      %710 = vmatpush2.bf16.msra.mxu0 0
      %711 = vmatprep.mubr.bf16.mxu0 0
      %712 = vmatmul.mubr.bf16.gmra.mxu0 %v674
      %v713 = vpop.f32.mrf.mxu0
      %v714 = vadd.f32 %v662, %v713
      %v715 = vpop.f32.mrf.mxu0
      %v716 = vpop.f32.mrf.mxu0
      %v717 = vpop.f32.mrf.mxu0
      %718 = vdwg.mxu0
      %v719 = vld [vmem:[%s7] sm:$0xf]
      %v720 = vld [vmem:[%s8] sm:$0x1]
      %v721 = vpack.c.bf16 %v714, %v714
      %v723 = vlaneseq
      %v724 = vshrl.u32 %v723, 7
      %v725 = vsub.s32 0, %v724
      %v726 = vrot.slane %v720, %v725
      %v729 = vsel %vm377, %v721, 0
      %v732 = vsel %vm581, %v719, 0
      %734 = vmatprep.subr.bf16.mxu0 0
      %735 = vmatpush1.bf16.msra.mxu0 0
      %736 = vmatprep.subr.bf16.mxu0 0
      %737 = vmatpush1.bf16.msra.mxu0 0
      %738 = vmatprep.subr.bf16.mxu0 0
      %739 = vmatpush1.bf16.msra.mxu0 0
      %740 = vmatprep.subr.bf16.mxu0 0
      %741 = vmatpush1.bf16.msra.mxu0 0
      %742 = vmatprep.subr.bf16.mxu0 0
      %743 = vmatpush1.bf16.msra.mxu0 0
      %744 = vmatprep.subr.bf16.mxu0 0
      %745 = vmatpush1.bf16.msra.mxu0 0
      %746 = vmatprep.subr.bf16.mxu0 0
      %747 = vmatpush1.bf16.msra.mxu0 0
      %748 = vmatprep.subr.bf16.mxu0 0
      %749 = vmatpush1.bf16.msra.mxu0 %v732
      %750 = vmatprep.subr.bf16.mxu0 0
      %751 = vmatpush2.bf16.msra.mxu0 0
      %752 = vmatprep.subr.bf16.mxu0 0
      %753 = vmatpush2.bf16.msra.mxu0 0
      %754 = vmatprep.subr.bf16.mxu0 0
      %755 = vmatpush2.bf16.msra.mxu0 0
      %756 = vmatprep.subr.bf16.mxu0 0
      %757 = vmatpush2.bf16.msra.mxu0 0
      %758 = vmatprep.subr.bf16.mxu0 0
      %759 = vmatpush2.bf16.msra.mxu0 0
      %760 = vmatprep.subr.bf16.mxu0 0
      %761 = vmatpush2.bf16.msra.mxu0 0
      %762 = vmatprep.subr.bf16.mxu0 0
      %763 = vmatpush2.bf16.msra.mxu0 0
      %764 = vmatprep.subr.bf16.mxu0 0
      %765 = vmatpush2.bf16.msra.mxu0 0
      %766 = vmatprep.mubr.bf16.mxu0 0
      %767 = vmatmul.mubr.bf16.gmra.mxu0 %v729
      %v768 = vpop.f32.mrf.mxu0
      %v769 = vadd.f32 %v726, %v768
      %v770 = vpop.f32.mrf.mxu0
      %v771 = vpop.f32.mrf.mxu0
      %v772 = vpop.f32.mrf.mxu0
      %773 = vdwg.mxu0
      %vm774 = vcmask 48128
      %775 = vst.msk [vmem:[%s330] sm:$0xff] %vm774, %v769
      %p776 = scmp.lt.s32.totalorder %s20, 1
      %s777 = scalar_select %p776, %s20, 1
      %s778 = smul.addr %s777, 8
      %s779 = scalar_lea.vmem %s9, %s778
      // Predicated region
      $region57: #{tvae_forward.2} parent=55 // pred_check
        %p780 = pneg %p232
      $region58: #{tvae_forward.2} parent=55 // pred_check_branch
        %782 = sbr.rel (%p780) target = $region60
      $region59: #{tvae_forward.2} parent=55 // pred_region
        _
      $region60: #{tvae_forward.2} parent=55 // pred_fallthru
        _
    $region56: #{tvae_forward.2} parent=5 // pred_fallthru
      _
    %p783 = scmp.le.s32.totalorder 2, %s15
    // Predicated region
    $region61: #{tvae_forward.2} parent=5 // pred_check
      %p784 = pneg %p783
    $region62: #{tvae_forward.2} parent=5 // pred_check_branch
      %786 = sbr.rel (%p784) target = $region64
    $region63: #{tvae_forward.2} parent=5 // pred_region
      %s787 = ssub.s32 %s15, 2
      // Predicated region
      $region65: #{tvae_forward.2} parent=63 // pred_check
        %p788 = pneg %p238
      $region66: #{tvae_forward.2} parent=63 // pred_check_branch
        %790 = sbr.rel (%p788) target = $region68
      $region67: #{tvae_forward.2} parent=63 // pred_region
        %p791 = scmp.lt.s32.totalorder %s21, 1
        %s792 = scalar_select %p791, %s21, 1
        %s793 = smul.addr %s792, 8
        %s794 = scalar_lea.vmem %s9, %s793
      $region68: #{tvae_forward.2} parent=63 // pred_fallthru
        _
    $region64: #{tvae_forward.2} parent=5 // pred_fallthru
      _
  $region6: #{tvae_forward.2} parent=0 // loop_footer
    %s19 = sadd.s32 1, %s15
  $region7: #{tvae_forward.2} parent=0 // loop_footer_branch
    %14 = sbr.rel target = $region3
  $region8: #{tvae_forward.2} parent=0 // loop_exit
    _

// kernel: tvae_forward.3
$region0: #{tvae_forward.3}
  #allocation0 [shape = 'u32[]', space=smem, size = 0x4, offset = 0x4, fixed_abs, tag = 'smem constant byte address 0x4 - core index']
  #allocation1 [shape = 'u32[144,128]{1,0:T(1,128)}', space=vmem, size = 0x12000, scoped, tag = 'internal scratch']
  %s0 = inlined_call_operand.vmem [shape: f32[2,8,2], index: 0, kind: input, shape index: {}]
  %s1 = inlined_call_operand.vmem [shape: bf16[2,4], index: 1, kind: input, shape index: {}]
  %s2 = inlined_call_operand.vmem [shape: f32[1,4], index: 2, kind: input, shape index: {}]
  %s3 = inlined_call_operand.vmem [shape: bf16[12,8], index: 3, kind: input, shape index: {}]
  %s4 = inlined_call_operand.vmem [shape: f32[1,8], index: 4, kind: input, shape index: {}]
  %s5 = inlined_call_operand.vmem [shape: bf16[24,8], index: 5, kind: input, shape index: {}]
  %s6 = inlined_call_operand.vmem [shape: f32[1,8], index: 6, kind: input, shape index: {}]
  %s7 = inlined_call_operand.vmem [shape: bf16[24,4], index: 7, kind: input, shape index: {}]
  %s8 = inlined_call_operand.vmem [shape: f32[1,4], index: 8, kind: input, shape index: {}]
  %s9 = inlined_call_operand.vmem [shape: f32[2,16,4], index: 9, kind: output, shape index: {}]
  %s10 = sld [smem:[#allocation0]]
  $region69: #{tvae_forward.3} parent=0
    _
  %s12 = ssub.s32 1, %s10
  %s13 = scalar_select 0, %s12, %s10
  loop: start=0, step=1, limit=4
  $region2: #{tvae_forward.3} parent=0 // loop_pre_header
    _
  $region3: #{tvae_forward.3} parent=0 // loop_header
    %s15 = sphi 0, %s19
    %p16 = scmp.ge.s32.totalorder %s15, 4
    %s25 = sphi 0, %s27
    %s28 = sphi 0, %s25
    %s29 = sphi 0, %s28
    %s45 = sphi 0, %s29
    %s49 = sphi 0, %s49
    %s51 = sphi 0, %s49
    %s52 = sphi 0, %s51
    %s66 = sphi 0, %s52
    %s70 = sphi 0, %s70
    %s72 = sphi 0, %s70
    %s73 = sphi 0, %s72
    %s87 = sphi 0, %s73
    %s91 = sphi 0, %s91
    %s93 = sphi 0, %s91
    %s94 = sphi 0, %s93
    %s108 = sphi 0, %s94
    %s112 = sphi 0, %s112
    %s114 = sphi 0, %s112
    %s115 = sphi 0, %s114
    %s129 = sphi 0, %s115
    %s133 = sphi 0, %s133
    %s135 = sphi 0, %s133
    %s136 = sphi 0, %s135
    %s150 = sphi 0, %s136
    %s154 = sphi 0, %s154
    %s156 = sphi 0, %s154
    %s157 = sphi 0, %s156
    %s171 = sphi 0, %s157
    %s175 = sphi 0, %s175
    %s177 = sphi 0, %s175
    %s178 = sphi 0, %s177
    %s192 = sphi 0, %s178
    %s196 = sphi 0, %s196
    %s198 = sphi 0, %s196
    %s199 = sphi 0, %s198
    %s213 = sphi 0, %s199
    %s219 = sphi 0, %s221
    %s222 = sphi 0, %s219
    %s223 = sphi 0, %s222
    %s239 = sphi 0, %s223
  $region4: #{tvae_forward.3} parent=0 // loop_header_branch
    %18 = sbr.rel (%p16) target = $region8
  $region5: #{tvae_forward.3} parent=0 // loop_body
    %s20 = ssub.s32 %s15, 1
    %s21 = ssub.s32 %s15, 2
    %s22 = sadd.s32 %s15, 1
    %s23 = ssub.s32 %s15, %s22
    %p24 = scmp.eq.s32.totalorder %s23, 0
    %s26 = sadd.s32 %s25, 1
    %s27 = scalar_select %p24, %s25, %s26
    %p30 = pneg %p24
    %p31 = scmp.eq.s32.totalorder %s15, 1
    %p32 = por %p30, %p31
    %p33 = scmp.ne.s32.totalorder %s25, %s28
    %p34 = scmp.eq.s32.totalorder %s15, 0
    %p35 = por %p33, %p34
    %p36 = scmp.ne.s32.totalorder %s25, %s28
    %p37 = scmp.eq.s32.totalorder %s20, 1
    %p38 = por %p36, %p37
    %p39 = scmp.ne.s32.totalorder %s28, %s29
    %p40 = scmp.eq.s32.totalorder %s20, 0
    %p41 = por %p39, %p40
    %p42 = scmp.ne.s32.totalorder %s28, %s29
    %p43 = scmp.eq.s32.totalorder %s21, 1
    %p44 = por %p42, %p43
    %p46 = scmp.ne.s32.totalorder %s29, %s45
    %p47 = scmp.eq.s32.totalorder %s21, 0
    %p48 = por %p46, %p47
    %s50 = sadd.s32 %s49, 1
    %p53 = scmp.eq.s32.totalorder %s15, 1
    %p54 = scmp.ne.s32.totalorder %s49, %s51
    %p55 = scmp.eq.s32.totalorder %s15, 0
    %p56 = por %p54, %p55
    %p57 = scmp.ne.s32.totalorder %s49, %s51
    %p58 = scmp.eq.s32.totalorder %s20, 1
    %p59 = por %p57, %p58
    %p60 = scmp.ne.s32.totalorder %s51, %s52
    %p61 = scmp.eq.s32.totalorder %s20, 0
    %p62 = por %p60, %p61
    %p63 = scmp.ne.s32.totalorder %s51, %s52
    %p64 = scmp.eq.s32.totalorder %s21, 1
    %p65 = por %p63, %p64
    %p67 = scmp.ne.s32.totalorder %s52, %s66
    %p68 = scmp.eq.s32.totalorder %s21, 0
    %p69 = por %p67, %p68
    %s71 = sadd.s32 %s70, 1
    %p74 = scmp.eq.s32.totalorder %s15, 1
    %p75 = scmp.ne.s32.totalorder %s70, %s72
    %p76 = scmp.eq.s32.totalorder %s15, 0
    %p77 = por %p75, %p76
    %p78 = scmp.ne.s32.totalorder %s70, %s72
    %p79 = scmp.eq.s32.totalorder %s20, 1
    %p80 = por %p78, %p79
    %p81 = scmp.ne.s32.totalorder %s72, %s73
    %p82 = scmp.eq.s32.totalorder %s20, 0
    %p83 = por %p81, %p82
    %p84 = scmp.ne.s32.totalorder %s72, %s73
    %p85 = scmp.eq.s32.totalorder %s21, 1
    %p86 = por %p84, %p85
    %p88 = scmp.ne.s32.totalorder %s73, %s87
    %p89 = scmp.eq.s32.totalorder %s21, 0
    %p90 = por %p88, %p89
    %s92 = sadd.s32 %s91, 1
    %p95 = scmp.eq.s32.totalorder %s15, 1
    %p96 = scmp.ne.s32.totalorder %s91, %s93
    %p97 = scmp.eq.s32.totalorder %s15, 0
    %p98 = por %p96, %p97
    %p99 = scmp.ne.s32.totalorder %s91, %s93
    %p100 = scmp.eq.s32.totalorder %s20, 1
    %p101 = por %p99, %p100
    %p102 = scmp.ne.s32.totalorder %s93, %s94
    %p103 = scmp.eq.s32.totalorder %s20, 0
    %p104 = por %p102, %p103
    %p105 = scmp.ne.s32.totalorder %s93, %s94
    %p106 = scmp.eq.s32.totalorder %s21, 1
    %p107 = por %p105, %p106
    %p109 = scmp.ne.s32.totalorder %s94, %s108
    %p110 = scmp.eq.s32.totalorder %s21, 0
    %p111 = por %p109, %p110
    %s113 = sadd.s32 %s112, 1
    %p116 = scmp.eq.s32.totalorder %s15, 1
    %p117 = scmp.ne.s32.totalorder %s112, %s114
    %p118 = scmp.eq.s32.totalorder %s15, 0
    %p119 = por %p117, %p118
    %p120 = scmp.ne.s32.totalorder %s112, %s114
    %p121 = scmp.eq.s32.totalorder %s20, 1
    %p122 = por %p120, %p121
    %p123 = scmp.ne.s32.totalorder %s114, %s115
    %p124 = scmp.eq.s32.totalorder %s20, 0
    %p125 = por %p123, %p124
    %p126 = scmp.ne.s32.totalorder %s114, %s115
    %p127 = scmp.eq.s32.totalorder %s21, 1
    %p128 = por %p126, %p127
    %p130 = scmp.ne.s32.totalorder %s115, %s129
    %p131 = scmp.eq.s32.totalorder %s21, 0
    %p132 = por %p130, %p131
    %s134 = sadd.s32 %s133, 1
    %p137 = scmp.eq.s32.totalorder %s15, 1
    %p138 = scmp.ne.s32.totalorder %s133, %s135
    %p139 = scmp.eq.s32.totalorder %s15, 0
    %p140 = por %p138, %p139
    %p141 = scmp.ne.s32.totalorder %s133, %s135
    %p142 = scmp.eq.s32.totalorder %s20, 1
    %p143 = por %p141, %p142
    %p144 = scmp.ne.s32.totalorder %s135, %s136
    %p145 = scmp.eq.s32.totalorder %s20, 0
    %p146 = por %p144, %p145
    %p147 = scmp.ne.s32.totalorder %s135, %s136
    %p148 = scmp.eq.s32.totalorder %s21, 1
    %p149 = por %p147, %p148
    %p151 = scmp.ne.s32.totalorder %s136, %s150
    %p152 = scmp.eq.s32.totalorder %s21, 0
    %p153 = por %p151, %p152
    %s155 = sadd.s32 %s154, 1
    %p158 = scmp.eq.s32.totalorder %s15, 1
    %p159 = scmp.ne.s32.totalorder %s154, %s156
    %p160 = scmp.eq.s32.totalorder %s15, 0
    %p161 = por %p159, %p160
    %p162 = scmp.ne.s32.totalorder %s154, %s156
    %p163 = scmp.eq.s32.totalorder %s20, 1
    %p164 = por %p162, %p163
    %p165 = scmp.ne.s32.totalorder %s156, %s157
    %p166 = scmp.eq.s32.totalorder %s20, 0
    %p167 = por %p165, %p166
    %p168 = scmp.ne.s32.totalorder %s156, %s157
    %p169 = scmp.eq.s32.totalorder %s21, 1
    %p170 = por %p168, %p169
    %p172 = scmp.ne.s32.totalorder %s157, %s171
    %p173 = scmp.eq.s32.totalorder %s21, 0
    %p174 = por %p172, %p173
    %s176 = sadd.s32 %s175, 1
    %p179 = scmp.eq.s32.totalorder %s15, 1
    %p180 = scmp.ne.s32.totalorder %s175, %s177
    %p181 = scmp.eq.s32.totalorder %s15, 0
    %p182 = por %p180, %p181
    %p183 = scmp.ne.s32.totalorder %s175, %s177
    %p184 = scmp.eq.s32.totalorder %s20, 1
    %p185 = por %p183, %p184
    %p186 = scmp.ne.s32.totalorder %s177, %s178
    %p187 = scmp.eq.s32.totalorder %s20, 0
    %p188 = por %p186, %p187
    %p189 = scmp.ne.s32.totalorder %s177, %s178
    %p190 = scmp.eq.s32.totalorder %s21, 1
    %p191 = por %p189, %p190
    %p193 = scmp.ne.s32.totalorder %s178, %s192
    %p194 = scmp.eq.s32.totalorder %s21, 0
    %p195 = por %p193, %p194
    %s197 = sadd.s32 %s196, 1
    %p200 = scmp.eq.s32.totalorder %s15, 1
    %p201 = scmp.ne.s32.totalorder %s196, %s198
    %p202 = scmp.eq.s32.totalorder %s15, 0
    %p203 = por %p201, %p202
    %p204 = scmp.ne.s32.totalorder %s196, %s198
    %p205 = scmp.eq.s32.totalorder %s20, 1
    %p206 = por %p204, %p205
    %p207 = scmp.ne.s32.totalorder %s198, %s199
    %p208 = scmp.eq.s32.totalorder %s20, 0
    %p209 = por %p207, %p208
    %p210 = scmp.ne.s32.totalorder %s198, %s199
    %p211 = scmp.eq.s32.totalorder %s21, 1
    %p212 = por %p210, %p211
    %p214 = scmp.ne.s32.totalorder %s199, %s213
    %p215 = scmp.eq.s32.totalorder %s21, 0
    %p216 = por %p214, %p215
    %s217 = ssub.s32 %s15, %s22
    %p218 = scmp.eq.s32.totalorder %s217, 0
    %s220 = sadd.s32 %s219, 1
    %s221 = scalar_select %p218, %s219, %s220
    %p224 = pneg %p218
    %p225 = scmp.eq.s32.totalorder %s15, 1
    %p226 = por %p224, %p225
    %p227 = scmp.ne.s32.totalorder %s219, %s222
    %p228 = scmp.eq.s32.totalorder %s15, 0
    %p229 = por %p227, %p228
    %p230 = scmp.ne.s32.totalorder %s219, %s222
    %p231 = scmp.eq.s32.totalorder %s20, 1
    %p232 = por %p230, %p231
    %p233 = scmp.ne.s32.totalorder %s222, %s223
    %p234 = scmp.eq.s32.totalorder %s20, 0
    %p235 = por %p233, %p234
    %p236 = scmp.ne.s32.totalorder %s222, %s223
    %p237 = scmp.eq.s32.totalorder %s21, 1
    %p238 = por %p236, %p237
    %p240 = scmp.ne.s32.totalorder %s223, %s239
    %p241 = scmp.eq.s32.totalorder %s21, 0
    %p242 = por %p240, %p241
    %p243 = scmp.le.s32.totalorder 1, %s15
    %p244 = scmp.lt.s32.totalorder %s15, 3
    %p245 = pnand %p243, %p244
    %p246 = pneg %p245
    // Predicated region
    $region9: #{tvae_forward.3} parent=5 // pred_check
      _
    $region10: #{tvae_forward.3} parent=5 // pred_check_branch
      %248 = sbr.rel (%p245) target = $region12
    $region11: #{tvae_forward.3} parent=5 // pred_region
      %s249 = ssub.s32 %s15, 1
      // Predicated region
      $region13: #{tvae_forward.3} parent=11 // pred_check
        %p250 = pneg %p62
      $region14: #{tvae_forward.3} parent=11 // pred_check_branch
        %252 = sbr.rel (%p250) target = $region16
      $region15: #{tvae_forward.3} parent=11 // pred_region
        _
      $region16: #{tvae_forward.3} parent=11 // pred_fallthru
        _
      // Predicated region
      $region17: #{tvae_forward.3} parent=11 // pred_check
        %p253 = pneg %p83
      $region18: #{tvae_forward.3} parent=11 // pred_check_branch
        %255 = sbr.rel (%p253) target = $region20
      $region19: #{tvae_forward.3} parent=11 // pred_region
        _
      $region20: #{tvae_forward.3} parent=11 // pred_fallthru
        _
      // Predicated region
      $region21: #{tvae_forward.3} parent=11 // pred_check
        %p256 = pneg %p104
      $region22: #{tvae_forward.3} parent=11 // pred_check_branch
        %258 = sbr.rel (%p256) target = $region24
      $region23: #{tvae_forward.3} parent=11 // pred_region
        _
      $region24: #{tvae_forward.3} parent=11 // pred_fallthru
        _
      // Predicated region
      $region25: #{tvae_forward.3} parent=11 // pred_check
        %p259 = pneg %p125
      $region26: #{tvae_forward.3} parent=11 // pred_check_branch
        %261 = sbr.rel (%p259) target = $region28
      $region27: #{tvae_forward.3} parent=11 // pred_region
        _
      $region28: #{tvae_forward.3} parent=11 // pred_fallthru
        _
      // Predicated region
      $region29: #{tvae_forward.3} parent=11 // pred_check
        %p262 = pneg %p146
      $region30: #{tvae_forward.3} parent=11 // pred_check_branch
        %264 = sbr.rel (%p262) target = $region32
      $region31: #{tvae_forward.3} parent=11 // pred_region
        _
      $region32: #{tvae_forward.3} parent=11 // pred_fallthru
        _
      // Predicated region
      $region33: #{tvae_forward.3} parent=11 // pred_check
        %p265 = pneg %p167
      $region34: #{tvae_forward.3} parent=11 // pred_check_branch
        %267 = sbr.rel (%p265) target = $region36
      $region35: #{tvae_forward.3} parent=11 // pred_region
        _
      $region36: #{tvae_forward.3} parent=11 // pred_fallthru
        _
      // Predicated region
      $region37: #{tvae_forward.3} parent=11 // pred_check
        %p268 = pneg %p188
      $region38: #{tvae_forward.3} parent=11 // pred_check_branch
        %270 = sbr.rel (%p268) target = $region40
      $region39: #{tvae_forward.3} parent=11 // pred_region
        _
      $region40: #{tvae_forward.3} parent=11 // pred_fallthru
        _
      // Predicated region
      $region41: #{tvae_forward.3} parent=11 // pred_check
        %p271 = pneg %p209
      $region42: #{tvae_forward.3} parent=11 // pred_check_branch
        %273 = sbr.rel (%p271) target = $region44
      $region43: #{tvae_forward.3} parent=11 // pred_region
        _
      $region44: #{tvae_forward.3} parent=11 // pred_fallthru
        _
    $region12: #{tvae_forward.3} parent=5 // pred_fallthru
      _
    %p274 = scmp.lt.s32.totalorder %s15, 2
    // Predicated region
    $region45: #{tvae_forward.3} parent=5 // pred_check
      %p275 = pneg %p274
    $region46: #{tvae_forward.3} parent=5 // pred_check_branch
      %277 = sbr.rel (%p275) target = $region48
    $region47: #{tvae_forward.3} parent=5 // pred_region
      // Predicated region
      $region49: #{tvae_forward.3} parent=47 // pred_check
        %p278 = pneg %p35
      $region50: #{tvae_forward.3} parent=47 // pred_check_branch
        %280 = sbr.rel (%p278) target = $region52
      $region51: #{tvae_forward.3} parent=47 // pred_region
        %p281 = scmp.lt.s32.totalorder %s15, 1
        %s282 = scalar_select %p281, %s15, 1
        %s283 = smul.addr %s282, 8
        %s284 = scalar_lea.vmem %s0, %s283
      $region52: #{tvae_forward.3} parent=47 // pred_fallthru
        _
    $region48: #{tvae_forward.3} parent=5 // pred_fallthru
      _
    %p285 = scmp.le.s32.totalorder 1, %s15
    %p286 = scmp.lt.s32.totalorder %s15, 3
    %p287 = pnand %p285, %p286
    %p288 = pneg %p287
    // Predicated region
    $region53: #{tvae_forward.3} parent=5 // pred_check
      _
    $region54: #{tvae_forward.3} parent=5 // pred_check_branch
      %290 = sbr.rel (%p287) target = $region56
    $region55: #{tvae_forward.3} parent=5 // pred_region
      %s291 = ssub.s32 %s15, 1
      %p292 = scmp.lt.s32.totalorder %s20, 1
      %s293 = scalar_select %p292, %s20, 1
      %s294 = smul.addr %s293, 8
      %s295 = scalar_lea.vmem %s0, %s294
      %p296 = pneg %p41
      %p297 = pneg %p38
      %p298 = pneg %p62
      %p299 = pneg %p59
      %p300 = pneg %p83
      %p301 = pneg %p80
      %p302 = pneg %p104
      %p303 = pneg %p101
      %p304 = pneg %p125
      %p305 = pneg %p122
      %p306 = pneg %p146
      %p307 = pneg %p143
      %p308 = pneg %p167
      %p309 = pneg %p164
      %p310 = pneg %p188
      %p311 = pneg %p185
      %p312 = pneg %p209
      %p313 = pneg %p206
      %p314 = pneg %p235
      %p315 = pneg %p232
      %p316 = scmp.lt.s32.totalorder %s20, 1
      %s317 = scalar_select %p316, %s20, 1
      %s318 = smul.addr %s317, 2
      %s319 = smul.addr %s318, 8
      %s320 = scalar_lea.vmem %s9, %s319
      %p321 = scmp.lt.s32.totalorder %s20, 1
      %s322 = scalar_select %p321, %s20, 1
      %s323 = smul.addr %s322, 8
      %s324 = scalar_lea.vmem %s0, %s323
      %p325 = scmp.lt.s32.totalorder %s20, 1
      %s326 = scalar_select %p325, %s20, 1
      %s327 = smul.addr %s326, 2
      %s328 = smul.addr %s327, 8
      %s329 = scalar_lea.vmem %s9, %s328
      %v331 = vld [vmem:[%s324] sm:$0xff]
      %v332 = vld [vmem:[%s1] sm:$0x1]
      %v333 = vld [vmem:[%s2] sm:$0x1]
      %v334 = vpack.c.bf16 %v331, %v331
      %v336 = vlaneseq
      %v337 = vshrl.u32 %v336, 7
      %v338 = vsub.s32 0, %v337
      %v339 = vrot.slane %v333, %v338
      %vm341 = vcmask 15360
      %v343 = vsel %vm341, %v334, 0
      %vm345 = vcmask 1040384
      %v347 = vsel %vm345, %v332, 0
      %349 = vmatprep.subr.bf16.mxu0 0
      %350 = vmatpush1.bf16.msra.mxu0 0
      %351 = vmatprep.subr.bf16.mxu0 0
      %352 = vmatpush1.bf16.msra.mxu0 0
      %353 = vmatprep.subr.bf16.mxu0 0
      %354 = vmatpush1.bf16.msra.mxu0 0
      %355 = vmatprep.subr.bf16.mxu0 0
      %356 = vmatpush1.bf16.msra.mxu0 0
      %357 = vmatprep.subr.bf16.mxu0 0
      %358 = vmatpush1.bf16.msra.mxu0 0
      %359 = vmatprep.subr.bf16.mxu0 0
      %360 = vmatpush1.bf16.msra.mxu0 0
      %361 = vmatprep.subr.bf16.mxu0 0
      %362 = vmatpush1.bf16.msra.mxu0 0
      %363 = vmatprep.subr.bf16.mxu0 0
      %364 = vmatpush1.bf16.msra.mxu0 %v347
      %365 = vmatprep.subr.bf16.mxu0 0
      %366 = vmatpush2.bf16.msra.mxu0 0
      %367 = vmatprep.subr.bf16.mxu0 0
      %368 = vmatpush2.bf16.msra.mxu0 0
      %369 = vmatprep.subr.bf16.mxu0 0
      %370 = vmatpush2.bf16.msra.mxu0 0
      %371 = vmatprep.subr.bf16.mxu0 0
      %372 = vmatpush2.bf16.msra.mxu0 0
      %373 = vmatprep.subr.bf16.mxu0 0
      %374 = vmatpush2.bf16.msra.mxu0 0
      %375 = vmatprep.subr.bf16.mxu0 0
      %376 = vmatpush2.bf16.msra.mxu0 0
      %377 = vmatprep.subr.bf16.mxu0 0
      %378 = vmatpush2.bf16.msra.mxu0 0
      %379 = vmatprep.subr.bf16.mxu0 0
      %380 = vmatpush2.bf16.msra.mxu0 0
      %381 = vmatprep.mubr.bf16.mxu0 0
      %382 = vmatmul.mubr.bf16.gmra.mxu0 %v343
      %v383 = vpop.f32.mrf.mxu0
      %v384 = vadd.f32 %v339, %v383
      %v385 = vpop.f32.mrf.mxu0
      %v386 = vpop.f32.mrf.mxu0
      %v387 = vpop.f32.mrf.mxu0
      %388 = vdwg.mxu0
      %v389 = vld [vmem:[%s3] sm:$0xf]
      %v390 = vld [vmem:[%s3 + $0x4] sm:$0x3]
      %v391 = vld [vmem:[%s4] sm:$0x1]
      %v393 = vrot.slane %v384, 7
      %v395 = vsel %vm345, 0.0, %v393
      %v396 = vsel %vm345, %v393, 0.0
      %vm399 = vcmask 1046528
      %v400 = vrot.slane %v395, 1
      %v401 = vrot.slane %v396, 1
      %v402 = vsel %vm399, %v400, %v401
      %403 = vrot.lane.b32.xlu0 %v402, 4
      %v404 = vpop.permute.xlu0 %403
      %vm406 = vcmask 1045504
      %v407 = vrot.slane %v395, 2
      %v408 = vrot.slane %v396, 2
      %v409 = vsel %vm406, %v407, %v408
      %410 = vrot.lane.b32.xlu0 %v409, 8
      %v411 = vpop.permute.xlu0 %410
      %vm413 = vcmask 31744
      %v414 = vsel %vm413, %v395, %v404
      %vm415 = vcmask 64512
      %v416 = vsel %vm415, %v414, %v411
      %v417 = vpack.c.bf16 %v416, %v416
      %v419 = vlaneseq
      %v420 = vshrl.u32 %v419, 7
      %v421 = vsub.s32 0, %v420
      %v422 = vrot.slane %v391, %v421
      %v426 = vunpack.c.l.b16 %v389
      %v427 = vunpack.c.l.b16 %v390
      %v428 = vpack.c.b16 %v427, %v426
      %vm429 = vcmask 97280
      %v431 = vsel %vm429, %v417, 0
      %v434 = vsel %vm406, %v428, 0
      %436 = vmatprep.subr.bf16.mxu0 0
      %437 = vmatpush1.bf16.msra.mxu0 0
      %438 = vmatprep.subr.bf16.mxu0 0
      %439 = vmatpush1.bf16.msra.mxu0 0
      %440 = vmatprep.subr.bf16.mxu0 0
      %441 = vmatpush1.bf16.msra.mxu0 0
      %442 = vmatprep.subr.bf16.mxu0 0
      %443 = vmatpush1.bf16.msra.mxu0 0
      %444 = vmatprep.subr.bf16.mxu0 0
      %445 = vmatpush1.bf16.msra.mxu0 0
      %446 = vmatprep.subr.bf16.mxu0 0
      %447 = vmatpush1.bf16.msra.mxu0 0
      %448 = vmatprep.subr.bf16.mxu0 0
      %449 = vmatpush1.bf16.msra.mxu0 0
      %450 = vmatprep.subr.bf16.mxu0 0
      %451 = vmatpush1.bf16.msra.mxu0 %v434
      %452 = vmatprep.subr.bf16.mxu0 0
      %453 = vmatpush2.bf16.msra.mxu0 0
      %454 = vmatprep.subr.bf16.mxu0 0
      %455 = vmatpush2.bf16.msra.mxu0 0
      %456 = vmatprep.subr.bf16.mxu0 0
      %457 = vmatpush2.bf16.msra.mxu0 0
      %458 = vmatprep.subr.bf16.mxu0 0
      %459 = vmatpush2.bf16.msra.mxu0 0
      %460 = vmatprep.subr.bf16.mxu0 0
      %461 = vmatpush2.bf16.msra.mxu0 0
      %462 = vmatprep.subr.bf16.mxu0 0
      %463 = vmatpush2.bf16.msra.mxu0 0
      %464 = vmatprep.subr.bf16.mxu0 0
      %465 = vmatpush2.bf16.msra.mxu0 0
      %466 = vmatprep.subr.bf16.mxu0 0
      %467 = vmatpush2.bf16.msra.mxu0 0
      %468 = vmatprep.mubr.bf16.mxu0 0
      %469 = vmatmul.mubr.bf16.gmra.mxu0 %v431
      %v470 = vpop.f32.mrf.mxu0
      %v471 = vadd.f32 %v422, %v470
      %v472 = vpop.f32.mrf.mxu0
      %v473 = vpop.f32.mrf.mxu0
      %v474 = vpop.f32.mrf.mxu0
      %475 = vdwg.mxu0
      %v476 = vxor.u32 %v471, 2147483648
      %v477 = vmul.f32 %v476, 1.442695
      %v478 = vpow.pop %v477
      %v479 = vadd.f32 %v478, 1.0
      %v480 = vrcp.pop %v479
      %v481 = vmul.f32 1.0, %v480
      %v482 = vmul.f32 %v471, %v481
      %v483 = vlaneseq
      %v484 = vshrl.u32 %v483, 7
      %v485 = vadd.s32 %v484, 8
      %v486 = vlaneseq
      %v487 = vand.u32 %v486, 127
      %v488 = vmul.u32 %v487, 2
      %vm489 = vcmp.eq.s32.totalorder %v488, %v484
      %vm490 = vcmp.eq.s32.totalorder %v488, %v485
      %v491 = vadd.s32 %v488, 1
      %vm492 = vcmp.eq.s32.totalorder %v491, %v484
      %vm493 = vcmp.eq.s32.totalorder %v491, %v485
      %vm494 = vmor %vm489, %vm492
      %vm495 = vmor %vm490, %vm493
      %v496 = vsel %vm494, 1, 0
      %v497 = vsel %vm495, 1, 0
      %v498 = vcvt.s32.f32 %v496
      %v499 = vcvt.s32.f32 %v497
      %v501 = vsel %vm415, %v498, 0
      %v504 = vsel %vm415, %v499, 0
      %506 = vmatprep.subr.mxu0 0.0
      %507 = vmatpush1.msra.mxu0 0.0
      %508 = vmatprep.subr.mxu0 0.0
      %509 = vmatpush1.msra.mxu0 0.0
      %510 = vmatprep.subr.mxu0 0.0
      %511 = vmatpush1.msra.mxu0 0.0
      %512 = vmatprep.subr.mxu0 0.0
      %513 = vmatpush1.msra.mxu0 0.0
      %514 = vmatprep.subr.mxu0 0.0
      %515 = vmatpush1.msra.mxu0 0.0
      %516 = vmatprep.subr.mxu0 0.0
      %517 = vmatpush1.msra.mxu0 0.0
      %518 = vmatprep.subr.mxu0 0.0
      %519 = vmatpush1.msra.mxu0 0.0
      %520 = vmatprep.subr.mxu0 0.0
      %521 = vmatpush1.msra.mxu0 0.0
      %522 = vmatprep.subr.mxu0 0.0
      %523 = vmatpush1.msra.mxu0 0.0
      %524 = vmatprep.subr.mxu0 0.0
      %525 = vmatpush1.msra.mxu0 0.0
      %526 = vmatprep.subr.mxu0 0.0
      %527 = vmatpush1.msra.mxu0 0.0
      %528 = vmatprep.subr.mxu0 0.0
      %529 = vmatpush1.msra.mxu0 0.0
      %530 = vmatprep.subr.mxu0 0.0
      %531 = vmatpush1.msra.mxu0 0.0
      %532 = vmatprep.subr.mxu0 0.0
      %533 = vmatpush1.msra.mxu0 0.0
      %534 = vmatprep.subr.mxu0 0.0
      %535 = vmatpush1.msra.mxu0 0.0
      %536 = vmatprep.subr.mxu0 0.0
      %537 = vmatpush1.msra.mxu0 %v482
      %538 = vmatprep.subr.mxu0 0.0
      %539 = vmatpush2.msra.mxu0 0.0
      %540 = vmatprep.subr.mxu0 0.0
      %541 = vmatpush2.msra.mxu0 0.0
      %542 = vmatprep.subr.mxu0 0.0
      %543 = vmatpush2.msra.mxu0 0.0
      %544 = vmatprep.subr.mxu0 0.0
      %545 = vmatpush2.msra.mxu0 0.0
      %546 = vmatprep.subr.mxu0 0.0
      %547 = vmatpush2.msra.mxu0 0.0
      %548 = vmatprep.subr.mxu0 0.0
      %549 = vmatpush2.msra.mxu0 0.0
      %550 = vmatprep.subr.mxu0 0.0
      %551 = vmatpush2.msra.mxu0 0.0
      %552 = vmatprep.subr.mxu0 0.0
      %553 = vmatpush2.msra.mxu0 0.0
      %554 = vmatprep.subr.mxu0 0.0
      %555 = vmatpush2.msra.mxu0 0.0
      %556 = vmatprep.subr.mxu0 0.0
      %557 = vmatpush2.msra.mxu0 0.0
      %558 = vmatprep.subr.mxu0 0.0
      %559 = vmatpush2.msra.mxu0 0.0
      %560 = vmatprep.subr.mxu0 0.0
      %561 = vmatpush2.msra.mxu0 0.0
      %562 = vmatprep.subr.mxu0 0.0
      %563 = vmatpush2.msra.mxu0 0.0
      %564 = vmatprep.subr.mxu0 0.0
      %565 = vmatpush2.msra.mxu0 0.0
      %566 = vmatprep.subr.mxu0 0.0
      %567 = vmatpush2.msra.mxu0 0.0
      %568 = vmatprep.subr.mxu0 0.0
      %569 = vmatpush2.msra.mxu0 0.0
      %570 = vmatprep.mubr.f32.mxu0 0.0
      %571 = vmatmul.mubr.f32.gmra.mxu0 %v501
      %v572 = vpop.f32.mrf.mxu0
      %v573 = vadd.f32 0.0, %v572
      %v574 = vpop.f32.mrf.mxu0
      %575 = vmatprep.mubr.f32.mxu0 0.0
      %576 = vmatmul.mubr.f32.gmra.mxu0 %v504
      %v577 = vpop.f32.mrf.mxu0
      %v578 = vadd.f32 0.0, %v577
      %v579 = vpop.f32.mrf.mxu0
      %580 = vdwg.mxu0
      %v581 = vld [vmem:[%s5] sm:$0xf]
      %v582 = vld [vmem:[%s5 + $0x4] sm:$0xf]
      %v583 = vld [vmem:[%s5 + $0x8] sm:$0xf]
      %v584 = vld [vmem:[%s6] sm:$0x1]
      %v587 = vrot.slane %v573, 7
      %v588 = vrot.slane %v578, 7
      %v589 = vsel %vm345, %v587, %v588
      %v593 = vsel %vm345, 0.0, %v587
      %v594 = vsel %vm345, %v588, 0.0
      %v597 = vrot.slane %v593, 1
      %v598 = vrot.slane %v589, 1
      %v599 = vsel %vm399, %v597, %v598
      %v600 = vrot.slane %v594, 1
      %v601 = vsel %vm399, %v598, %v600
      %602 = vrot.lane.b32.xlu0 %v599, 8
      %v603 = vpop.permute.xlu0 %602
      %604 = vrot.lane.b32.xlu0 %v601, 8
      %v605 = vpop.permute.xlu0 %604
      %v608 = vrot.slane %v593, 2
      %v609 = vrot.slane %v589, 2
      %v610 = vsel %vm406, %v608, %v609
      %v611 = vrot.slane %v594, 2
      %v612 = vsel %vm406, %v609, %v611
      %613 = vrot.lane.b32.xlu0 %v610, 16
      %v614 = vpop.permute.xlu0 %613
      %615 = vrot.lane.b32.xlu0 %v612, 16
      %v616 = vpop.permute.xlu0 %615
      %v619 = vsel %vm415, %v593, %v603
      %v620 = vsel %vm415, %v589, %v605
      %vm621 = vcmask 130048
      %v622 = vsel %vm621, %v619, %v614
      %v623 = vsel %vm621, %v620, %v616
      %v624 = vpack.c.bf16 %v623, %v622
      %v626 = vlaneseq
      %v627 = vshrl.u32 %v626, 7
      %v628 = vsub.s32 0, %v627
      %v629 = vrot.slane %v584, %v628
      %v634 = vunpack.c.l.b16 %v581
      %v635 = vunpack.c.l.b16 %v582
      %v636 = vunpack.c.l.b16 %v583
      %v637 = vpack.c.b16 %v635, %v634
      %v638 = vpack.c.b16 %v636, %v636
      %vm640 = vcmask 195584
      %v642 = vsel %vm640, %v624, 0
      %vm644 = vcmask 1043456
      %v646 = vsel %vm644, %v638, 0
      %648 = vmatprep.subr.bf16.mxu0 0
      %649 = vmatpush1.bf16.msra.mxu0 0
      %650 = vmatprep.subr.bf16.mxu0 0
      %651 = vmatpush1.bf16.msra.mxu0 0
      %652 = vmatprep.subr.bf16.mxu0 0
      %653 = vmatpush1.bf16.msra.mxu0 0
      %654 = vmatprep.subr.bf16.mxu0 0
      %655 = vmatpush1.bf16.msra.mxu0 0
      %656 = vmatprep.subr.bf16.mxu0 0
      %657 = vmatpush1.bf16.msra.mxu0 0
      %658 = vmatprep.subr.bf16.mxu0 0
      %659 = vmatpush1.bf16.msra.mxu0 0
      %660 = vmatprep.subr.bf16.mxu0 0
      %661 = vmatpush1.bf16.msra.mxu0 %v646
      %662 = vmatprep.subr.bf16.mxu0 0
      %663 = vmatpush1.bf16.msra.mxu0 %v637
      %664 = vmatprep.subr.bf16.mxu0 0
      %665 = vmatpush2.bf16.msra.mxu0 0
      %666 = vmatprep.subr.bf16.mxu0 0
      %667 = vmatpush2.bf16.msra.mxu0 0
      %668 = vmatprep.subr.bf16.mxu0 0
      %669 = vmatpush2.bf16.msra.mxu0 0
      %670 = vmatprep.subr.bf16.mxu0 0
      %671 = vmatpush2.bf16.msra.mxu0 0
      %672 = vmatprep.subr.bf16.mxu0 0
      %673 = vmatpush2.bf16.msra.mxu0 0
      %674 = vmatprep.subr.bf16.mxu0 0
      %675 = vmatpush2.bf16.msra.mxu0 0
      %676 = vmatprep.subr.bf16.mxu0 0
      %677 = vmatpush2.bf16.msra.mxu0 0
      %678 = vmatprep.subr.bf16.mxu0 0
      %679 = vmatpush2.bf16.msra.mxu0 0
      %680 = vmatprep.mubr.bf16.mxu0 0
      %681 = vmatmul.mubr.bf16.gmra.mxu0 %v642
      %v682 = vpop.f32.mrf.mxu0
      %v683 = vadd.f32 %v629, %v682
      %v684 = vpop.f32.mrf.mxu0
      %v685 = vpop.f32.mrf.mxu0
      %v686 = vadd.f32 %v629, %v685
      %v687 = vpop.f32.mrf.mxu0
      %688 = vdwg.mxu0
      %v689 = vxor.u32 %v683, 2147483648
      %v690 = vxor.u32 %v686, 2147483648
      %v691 = vmul.f32 %v689, 1.442695
      %v692 = vpow.pop %v691
      %v693 = vmul.f32 %v690, 1.442695
      %v694 = vpow.pop %v693
      %v695 = vadd.f32 %v692, 1.0
      %v696 = vadd.f32 %v694, 1.0
      %v697 = vrcp.pop %v695
      %v698 = vmul.f32 1.0, %v697
      %v699 = vrcp.pop %v696
      %v700 = vmul.f32 1.0, %v699
      %v701 = vmul.f32 %v683, %v698
      %v702 = vmul.f32 %v686, %v700
      %v703 = vld [vmem:[%s7] sm:$0xf]
      %v704 = vld [vmem:[%s7 + $0x4] sm:$0xf]
      %v705 = vld [vmem:[%s7 + $0x8] sm:$0xf]
      %v706 = vld [vmem:[%s8] sm:$0x1]
      %v709 = vrot.slane %v701, 7
      %v710 = vrot.slane %v702, 7
      %v711 = vsel %vm345, %v709, %v710
      %v715 = vsel %vm345, 0.0, %v709
      %v716 = vsel %vm345, %v710, 0.0
      %v719 = vrot.slane %v715, 1
      %v720 = vrot.slane %v711, 1
      %v721 = vsel %vm399, %v719, %v720
      %v722 = vrot.slane %v716, 1
      %v723 = vsel %vm399, %v720, %v722
      %724 = vrot.lane.b32.xlu0 %v721, 8
      %v725 = vpop.permute.xlu0 %724
      %726 = vrot.lane.b32.xlu0 %v723, 8
      %v727 = vpop.permute.xlu0 %726
      %v730 = vrot.slane %v715, 2
      %v731 = vrot.slane %v711, 2
      %v732 = vsel %vm406, %v730, %v731
      %v733 = vrot.slane %v716, 2
      %v734 = vsel %vm406, %v731, %v733
      %735 = vrot.lane.b32.xlu0 %v732, 16
      %v736 = vpop.permute.xlu0 %735
      %737 = vrot.lane.b32.xlu0 %v734, 16
      %v738 = vpop.permute.xlu0 %737
      %v741 = vsel %vm415, %v715, %v725
      %v742 = vsel %vm415, %v711, %v727
      %v743 = vsel %vm621, %v741, %v736
      %v744 = vsel %vm621, %v742, %v738
      %v745 = vpack.c.bf16 %v744, %v743
      %v747 = vlaneseq
      %v748 = vshrl.u32 %v747, 7
      %v749 = vsub.s32 0, %v748
      %v750 = vrot.slane %v706, %v749
      %v755 = vunpack.c.l.b16 %v703
      %v756 = vunpack.c.l.b16 %v704
      %v757 = vunpack.c.l.b16 %v705
      %v758 = vpack.c.b16 %v756, %v755
      %v759 = vpack.c.b16 %v757, %v757
      %v762 = vsel %vm640, %v745, 0
      %v765 = vsel %vm644, %v759, 0
      %767 = vmatprep.subr.bf16.mxu0 0
      %768 = vmatpush1.bf16.msra.mxu0 0
      %769 = vmatprep.subr.bf16.mxu0 0
      %770 = vmatpush1.bf16.msra.mxu0 0
      %771 = vmatprep.subr.bf16.mxu0 0
      %772 = vmatpush1.bf16.msra.mxu0 0
      %773 = vmatprep.subr.bf16.mxu0 0
      %774 = vmatpush1.bf16.msra.mxu0 0
      %775 = vmatprep.subr.bf16.mxu0 0
      %776 = vmatpush1.bf16.msra.mxu0 0
      %777 = vmatprep.subr.bf16.mxu0 0
      %778 = vmatpush1.bf16.msra.mxu0 0
      %779 = vmatprep.subr.bf16.mxu0 0
      %780 = vmatpush1.bf16.msra.mxu0 %v765
      %781 = vmatprep.subr.bf16.mxu0 0
      %782 = vmatpush1.bf16.msra.mxu0 %v758
      %783 = vmatprep.subr.bf16.mxu0 0
      %784 = vmatpush2.bf16.msra.mxu0 0
      %785 = vmatprep.subr.bf16.mxu0 0
      %786 = vmatpush2.bf16.msra.mxu0 0
      %787 = vmatprep.subr.bf16.mxu0 0
      %788 = vmatpush2.bf16.msra.mxu0 0
      %789 = vmatprep.subr.bf16.mxu0 0
      %790 = vmatpush2.bf16.msra.mxu0 0
      %791 = vmatprep.subr.bf16.mxu0 0
      %792 = vmatpush2.bf16.msra.mxu0 0
      %793 = vmatprep.subr.bf16.mxu0 0
      %794 = vmatpush2.bf16.msra.mxu0 0
      %795 = vmatprep.subr.bf16.mxu0 0
      %796 = vmatpush2.bf16.msra.mxu0 0
      %797 = vmatprep.subr.bf16.mxu0 0
      %798 = vmatpush2.bf16.msra.mxu0 0
      %799 = vmatprep.mubr.bf16.mxu0 0
      %800 = vmatmul.mubr.bf16.gmra.mxu0 %v762
      %v801 = vpop.f32.mrf.mxu0
      %v802 = vadd.f32 %v750, %v801
      %v803 = vpop.f32.mrf.mxu0
      %v804 = vpop.f32.mrf.mxu0
      %v805 = vadd.f32 %v750, %v804
      %v806 = vpop.f32.mrf.mxu0
      %807 = vdwg.mxu0
      %808 = vst.msk [vmem:[%s329] sm:$0xff] %vm413, %v802
      %809 = vst.msk [vmem:[%s329 + $0x8] sm:$0xff] %vm413, %v805
      %p810 = scmp.lt.s32.totalorder %s20, 1
      %s811 = scalar_select %p810, %s20, 1
      %s812 = smul.addr %s811, 2
      %s813 = smul.addr %s812, 8
      %s814 = scalar_lea.vmem %s9, %s813
      // Predicated region
      $region57: #{tvae_forward.3} parent=55 // pred_check
        %p815 = pneg %p232
      $region58: #{tvae_forward.3} parent=55 // pred_check_branch
        %817 = sbr.rel (%p815) target = $region60
      $region59: #{tvae_forward.3} parent=55 // pred_region
        _
      $region60: #{tvae_forward.3} parent=55 // pred_fallthru
        _
    $region56: #{tvae_forward.3} parent=5 // pred_fallthru
      _
    %p818 = scmp.le.s32.totalorder 2, %s15
    // Predicated region
    $region61: #{tvae_forward.3} parent=5 // pred_check
      %p819 = pneg %p818
    $region62: #{tvae_forward.3} parent=5 // pred_check_branch
      %821 = sbr.rel (%p819) target = $region64
    $region63: #{tvae_forward.3} parent=5 // pred_region
      %s822 = ssub.s32 %s15, 2
      // Predicated region
      $region65: #{tvae_forward.3} parent=63 // pred_check
        %p823 = pneg %p238
      $region66: #{tvae_forward.3} parent=63 // pred_check_branch
        %825 = sbr.rel (%p823) target = $region68
      $region67: #{tvae_forward.3} parent=63 // pred_region
        %p826 = scmp.lt.s32.totalorder %s21, 1
        %s827 = scalar_select %p826, %s21, 1
        %s828 = smul.addr %s827, 2
        %s829 = smul.addr %s828, 8
        %s830 = scalar_lea.vmem %s9, %s829
      $region68: #{tvae_forward.3} parent=63 // pred_fallthru
        _
    $region64: #{tvae_forward.3} parent=5 // pred_fallthru
      _
  $region6: #{tvae_forward.3} parent=0 // loop_footer
    %s19 = sadd.s32 1, %s15
  $region7: #{tvae_forward.3} parent=0 // loop_footer_branch
    %14 = sbr.rel target = $region3
  $region8: #{tvae_forward.3} parent=0 // loop_exit
    _

</llo_original>
